<compile_context>
chip_gen: v7x
topology: tpu7x:2x2x1
jax: 0.10.0
libtpu: 0.0.40
codegen_flags: <defaults>
</compile_context>

<pallas_src>
import functools

import jax
import jax.numpy as jnp
from jax import lax
from jax.experimental import pallas as pl
from jax.experimental.pallas import tpu as pltpu

_LANE = 128
_BN_EPS = 1e-5


def _round_up(x, m):
    return (x + m - 1) // m * m


def _tpu_config():
    """(vmem_budget_bytes, mxu_cols) per TPU generation (trace-time query)."""
    try:
        kind = jax.devices()[0].device_kind.lower()
    except Exception:          # CPU / interpret fallback
        kind = ""
    if "v7" in kind:
        return 48 << 20, 256   # 64 MiB VMEM per TensorCore -> keep headroom
    if "v6" in kind:
        return 96 << 20, 256   # 128 MiB VMEM, 256-wide MXU
    if "v4" in kind or "v5" in kind:
        return 96 << 20, 128   # 128 MiB VMEM, 128-wide MXU
    return 48 << 20, 128       # unknown: conservative


def _vmem_estimate(th, wp, k_in, k_mm, wo, tco, halo, out_bytes):
    """Per-grid-step VMEM bytes: 2x-buffered pipeline blocks + in-kernel temps."""
    b = 2 * th * wp * k_in * 2                     # x main block (bf16), double-buffered
    if halo:
        b += 2 * 2 * wp * k_in * 2                 # 2-row halo block
    b += 2 * 3 * k_mm * tco * 2                    # weight block (bf16)
    b += 2 * th * wo * tco * out_bytes             # output block
    b += 2 * 8 * tco * 4                           # BN stats block
    b += th * wp * k_mm * 2                        # lhs / x_cat (bf16)
    if halo:
        b += (th + 2) * wp * k_in * 2              # slab concat
    b += 2 * th * wp * tco * 4                     # acc + rolled matmul result (f32)
    return b


def _choose_th(h, n_batch, fits):
    """Largest even row tile that fits the VMEM budget; fewest grid steps wins.
    If N == 1, bias toward >= 2 row tiles so the parallel grid can split
    across v7x's two TensorCores."""
    cap = max(2, _round_up(h, 2))
    cands = [t for t in (256, 128, 64, 32, 16, 8, 4, 2) if t <= cap and fits(t)]
    if not cands:
        return None
    nsteps = lambda t: -(-h // t)
    cands.sort(key=lambda t: (nsteps(t), _round_up(h, t), -t))
    best = cands[0]
    if n_batch == 1 and nsteps(best) < 2:
        multi = [t for t in cands if nsteps(t) >= 2]
        if multi:
            best = multi[0]
    return best


# ----------------------------------------------------------------------------
# Kernel bodies.  dx taps handled by 3 MXU matmuls + output rolls (XLU slot);
# dy taps folded into the contraction dim (in the wrapper for small Cin, in
# the kernel via a lane-aligned concat for large Cin).
# ----------------------------------------------------------------------------
def _accumulate(lhs, w_ref, b_ref):
    n_rows = lhs.shape[0]
    # dx = 0 needs no roll: fold bias into the first matmul's epilogue
    # (no zeros materialization / extra VALU add).
    acc = jnp.dot(lhs, w_ref[0], preferred_element_type=jnp.float32) + b_ref[...]
    for dx in (1, 2):
        y = jnp.dot(lhs, w_ref[dx], preferred_element_type=jnp.float32)
        # out[., col] needs y[., col + dx]; wrapped elements only land in
        # discarded junk columns (wp - 2 >= W, asserted in the wrapper).
        # TODO(synk): on v7x, if a bundle dump shows the two f32 rolls binding
        #             the XLU, roll the (smaller) bf16 lhs instead.
        acc = acc + pltpu.roll(y, shift=n_rows - dx, axis=0)
    return acc


def _finish(acc, o_ref, stat_refs, th, wp, apply_relu, emit_stats,
            h_valid, w_valid):
    cout_t = o_ref.shape[-1]
    wo = o_ref.shape[2]
    acc3 = acc.reshape(th, wp, cout_t)
    if emit_stats:
        # Per-channel partial sum / sum-of-squares over *valid* pixels only
        # (junk rows/cols masked).  Accumulated in f32; free filler under MXU.
        col = lax.broadcasted_iota(jnp.int32, (th, wp), 1)
        row = lax.broadcasted_iota(jnp.int32, (th, wp), 0) + pl.program_id(1) * th
        valid = ((col < w_valid) & (row < h_valid))[:, :, None]
        vacc = jnp.where(valid, acc3, 0.0).reshape(th * wp, cout_t)
        s1 = jnp.sum(vacc, axis=0, keepdims=True)
        s2 = jnp.sum(vacc * vacc, axis=0, keepdims=True)
        ridx = lax.broadcasted_iota(jnp.int32, (8, cout_t), 0)
        stat_refs[0][0, 0, :, :] = (jnp.where(ridx == 0, s1, 0.0)
                                    + jnp.where(ridx == 1, s2, 0.0))
    out = acc3[:, :wo, :]          # wo is 8-aligned -> sublane-aligned slice
    if apply_relu:
        out = jnp.maximum(out, 0.0)
    o_ref[0, :, :, :] = out.astype(o_ref.dtype)


def _conv_folded_kernel(x_ref, w_ref, b_ref, o_ref, *stat_refs,
                        apply_relu, emit_stats, h_valid, w_valid):
    # Small-Cin path: dy already folded into K in the wrapper (K padded to 128).
    _, th, wp, kp = x_ref.shape
    lhs = x_ref[0].reshape(th * wp, kp)
    acc = _accumulate(lhs, w_ref, b_ref)
    _finish(acc, o_ref, stat_refs, th, wp, apply_relu, emit_stats, h_valid, w_valid)


def _conv_halo_kernel(x_main_ref, x_halo_ref, w_ref, b_ref, o_ref, *stat_refs,
                      apply_relu, emit_stats, h_valid, w_valid):
    # Large-Cin path: TH-row block + 2-row halo block; dy folded into K via a
    # lane-aligned concat (Cin padded to 128k).
    # TODO(synk): if the concat's vst traffic binds on v5e, switch to 3
    #             per-dy matmuls on slab[dy:th+dy] slices (K = cin_p).
    _, th, wp, cin_p = x_main_ref.shape
    slab = jnp.concatenate([x_main_ref[0], x_halo_ref[0]], axis=0)   # (TH+2,Wp,C)
    x_cat = jnp.concatenate(
        [slab[0:th], slab[1:th + 1], slab[2:th + 2]], axis=-1)       # (TH,Wp,3C)
    lhs = x_cat.reshape(th * wp, 3 * cin_p)
    acc = _accumulate(lhs, w_ref, b_ref)
    _finish(acc, o_ref, stat_refs, th, wp, apply_relu, emit_stats, h_valid, w_valid)


# ----------------------------------------------------------------------------
# Wrapper: Conv3BN.forward
# ----------------------------------------------------------------------------
def conv3bn_forward(x_nchw, weight_oihw, bias, gamma=None, beta=None, *,
                    use_bn: bool = False):
    """x_nchw: (N, Cin, H, W); weight_oihw: (Cout, Cin, 3, 3); bias: (Cout,).
    Returns (N, Cout, H, W) float32, matching Conv3BN.forward (BN uses batch
    statistics, i.e. training mode).
    Numerics contract: the MXU is fed bf16 (f32 accumulation); on the BN path
    the conv intermediate is stored in bf16 while BN stats stay f32."""
    N, Cin, H, W = x_nchw.shape
    Cout = weight_oihw.shape[0]

    budget, mxu_cols = _tpu_config()
    cout_p = _round_up(Cout, _LANE)
    tco = min(cout_p, max(_LANE, mxu_cols))   # Cout tile sized to the MXU width
    wp = _round_up(W + 2, 16)                 # padded input width (bf16 granule)
    wo = _round_up(W, 8)                      # padded output width (f32 granule)
    assert wp >= W + 2 and wp - 2 >= W and wo <= wp

    # Small-Cin path: fold dy into K in the wrapper (K stays at 128 instead of
    # 3*128 mostly-zeros; removes the in-kernel concat and the halo block).
    folded = (3 * Cin) <= _LANE
    if folded:
        k_in = _LANE              # folded K (3*Cin) padded to one lane group
        k_mm = k_in
    else:
        k_in = _round_up(Cin, _LANE)
        k_mm = 3 * k_in
    out_bytes = 2 if use_bn else 4   # BN path stores the conv intermediate bf16

    def _pick(tco_):
        fits = lambda t: _vmem_estimate(t, wp, k_in, k_mm, wo, tco_,
                                        not folded, out_bytes) <= int(budget * 0.85)
        return _choose_th(H, N, fits)

    th = _pick(tco)
    if th is None and tco > _LANE:
        tco = _LANE
        th = _pick(tco)
    if th is None:
        th = 2
    assert th % 2 == 0                 # halo index_map uses th // 2
    h_pad = _round_up(H, th)
    nh = h_pad // th
    nc = cout_p // tco

    # ---- wrapper glue: NCHW -> NHWC, cast, zero-pad, fold weights ----
    x_nhwc = jnp.transpose(x_nchw, (0, 2, 3, 1)).astype(jnp.bfloat16)
    if folded:
        x_sp = jnp.pad(x_nhwc, ((0, 0), (1, h_pad - H + 1), (1, wp - W - 1), (0, 0)))
        x_fold = jnp.concatenate([x_sp[:, dy:dy + h_pad] for dy in range(3)], axis=-1)
        x_in = jnp.pad(x_fold, ((0, 0), (0, 0), (0, 0), (0, k_in - 3 * Cin)))
        w_k = jnp.transpose(weight_oihw, (3, 2, 1, 0)).reshape(3, 3 * Cin, Cout)
        w_k = jnp.pad(w_k, ((0, 0), (0, k_in - 3 * Cin), (0, cout_p - Cout)))
    else:
        x_in = jnp.pad(x_nhwc, ((0, 0), (1, h_pad - H + 1), (1, wp - W - 1),
                                (0, k_in - Cin)))
        w_k = jnp.transpose(weight_oihw, (3, 2, 1, 0))        # (dx, dy, c, o)
        w_k = jnp.pad(w_k, ((0, 0), (0, 0), (0, k_in - Cin), (0, cout_p - Cout)))
        w_k = w_k.reshape(3, 3 * k_in, cout_p)
    w_k = w_k.astype(jnp.bfloat16)
    b2 = jnp.pad(bias.astype(jnp.float32), (0, cout_p - Cout)).reshape(1, cout_p)

    grid = (N, nh, nc)
    o_spec = pl.BlockSpec((1, th, wo, tco), lambda b, i, j: (b, i, 0, j))
    w_spec = pl.BlockSpec((3, k_mm, tco), lambda b, i, j: (0, 0, j))
    vec_spec = pl.BlockSpec((1, tco), lambda b, i, j: (0, j))
    conv_dtype = jnp.bfloat16 if use_bn else jnp.float32
    conv_shape = jax.ShapeDtypeStruct((N, h_pad, wo, cout_p), conv_dtype)

    kern_kw = dict(apply_relu=not use_bn, emit_stats=use_bn, h_valid=H, w_valid=W)
    if folded:
        kernel = functools.partial(_conv_folded_kernel, **kern_kw)
        in_specs = [pl.BlockSpec((1, th, wp, k_in), lambda b, i, j: (b, i, 0, 0)),
                    w_spec, vec_spec]
        inputs = (x_in, w_k, b2)
    else:
        kernel = functools.partial(_conv_halo_kernel, **kern_kw)
        in_specs = [pl.BlockSpec((1, th, wp, k_in), lambda b, i, j: (b, i, 0, 0)),
                    pl.BlockSpec((1, 2, wp, k_in),
                                 lambda b, i, j: (b, (i + 1) * (th // 2), 0, 0)),
                    w_spec, vec_spec]
        inputs = (x_in, x_in, w_k, b2)

    if use_bn:
        out_specs = (o_spec,
                     pl.BlockSpec((1, 1, 8, tco), lambda b, i, j: (b, i, 0, j)))
        out_shape = (conv_shape,
                     jax.ShapeDtypeStruct((N, nh, 8, cout_p), jnp.float32))
    else:
        out_specs = o_spec
        out_shape = conv_shape

    cparams = pltpu.CompilerParams(
        dimension_semantics=("parallel", "parallel", "parallel"),
        vmem_limit_bytes=int(budget))

    res = pl.pallas_call(kernel, grid=grid, in_specs=in_specs,
                         out_specs=out_specs, out_shape=out_shape,
                         compiler_params=cparams)(*inputs)

    if use_bn:
        assert gamma is not None and beta is not None
        conv_out, stats = res
        cnt = jnp.asarray(N * H * W, jnp.float32)
        s1 = jnp.sum(stats[:, :, 0, :Cout], axis=(0, 1))
        s2 = jnp.sum(stats[:, :, 1, :Cout], axis=(0, 1))
        mean = s1 / cnt
        # NOTE: single-pass E[x^2] - mean^2 in f32 — fine at these magnitudes;
        # switch to a two-pass / Welford form if activations get large.
        var = jnp.maximum(s2 / cnt - mean * mean, 0.0)
        inv = lax.rsqrt(var + _BN_EPS)
        g = gamma.astype(jnp.float32)
        scale = (g * inv).reshape(1, 1, 1, Cout)
        shift = (beta.astype(jnp.float32) - mean * g * inv).reshape(1, 1, 1, Cout)
        # Affine + ReLU fused by XLA into the mandatory slice + NCHW transpose
        # epilogue (no second pallas_call, no extra HBM round-trip).
        # TODO(synk): running_mean / running_var EMA update not modeled.
        y = conv_out[:, :H, :W, :Cout].astype(jnp.float32)
        y = jnp.maximum(y * scale + shift, 0.0)
        return jnp.transpose(y, (0, 3, 1, 2))
    return jnp.transpose(res[:, :H, :W, :Cout], (0, 3, 1, 2))


# ----------------------------------------------------------------------------
# Pure-JAX reference, mirroring the kernel's numerics contract (bf16 operands
# into the conv, f32 accumulation; BN path rounds the conv intermediate to
# bf16 while the batch statistics stay f32).
# ----------------------------------------------------------------------------
def _reference(x_nchw, weight_oihw, bias, gamma, beta, use_bn):
    x = x_nchw.astype(jnp.bfloat16).astype(jnp.float32)
    w = weight_oihw.astype(jnp.bfloat16).astype(jnp.float32)
    y = lax.conv_general_dilated(
        x, w, window_strides=(1, 1), padding=((1, 1), (1, 1)),
        dimension_numbers=("NCHW", "OIHW", "NCHW"),
        precision=lax.Precision.HIGHEST)
    y = y + bias.astype(jnp.float32).reshape(1, -1, 1, 1)
    if use_bn:
        mean = jnp.mean(y, axis=(0, 2, 3), keepdims=True)
        var = jnp.mean((y - mean) ** 2, axis=(0, 2, 3), keepdims=True)
        yq = y.astype(jnp.bfloat16).astype(jnp.float32)
        y = (yq - mean) * lax.rsqrt(var + _BN_EPS)
        y = y * gamma.reshape(1, -1, 1, 1) + beta.reshape(1, -1, 1, 1)
    return jnp.maximum(y, 0.0)


def _check(name, out, ref, atol, rtol):
    assert out.shape == ref.shape, (name, out.shape, ref.shape)
    err = float(jnp.max(jnp.abs(out - ref)))
    assert jnp.allclose(out, ref, atol=atol, rtol=rtol), (name, err)


if __name__ == "__main__":
    key = jax.random.PRNGKey(0)
    kx, kw, kb, kg, kbt, kx2, kw2 = jax.random.split(key, 7)

    # --- Case A: small-Cin folded path (the module's typical entry layers) ---
    N, Cin, H, W, Cout = 2, 4, 16, 16, 8
    x = jax.random.normal(kx, (N, Cin, H, W), jnp.float32)
    weight = jax.random.normal(kw, (Cout, Cin, 3, 3), jnp.float32) * 0.1
    bias = jax.random.normal(kb, (Cout,), jnp.float32) * 0.1
    gamma = 1.0 + 0.1 * jax.random.normal(kg, (Cout,), jnp.float32)
    beta = 0.1 * jax.random.normal(kbt, (Cout,), jnp.float32)

    fwd_nobn = jax.jit(lambda x_, w_, b_: conv3bn_forward(x_, w_, b_, use_bn=False))
    out = jax.block_until_ready(fwd_nobn(x, weight, bias))
    _check("A/no-bn", out, _reference(x, weight, bias, gamma, beta, False),
           atol=3e-3, rtol=3e-3)

    fwd_bn = jax.jit(lambda x_, w_, b_, g_, bt_:
                     conv3bn_forward(x_, w_, b_, g_, bt_, use_bn=True))
    out = jax.block_until_ready(fwd_bn(x, weight, bias, gamma, beta))
    # bf16 conv intermediate on the BN path -> tolerance of about one bf16 ulp
    # of the pre-normalization activation (documented numerics contract).
    _check("A/bn", out, _reference(x, weight, bias, gamma, beta, True),
           atol=2e-2, rtol=2e-2)

    # --- Case B: larger-Cin halo path + non-aligned H/W (exercises masking) ---
    N2, Cin2, H2, W2, Cout2 = 1, 48, 13, 10, 8
    x2 = jax.random.normal(kx2, (N2, Cin2, H2, W2), jnp.float32)
    weight2 = jax.random.normal(kw2, (Cout2, Cin2, 3, 3), jnp.float32) * 0.05
    out2 = jax.block_until_ready(fwd_bn(x2, weight2, bias, gamma, beta))
    _check("B/bn", out2, _reference(x2, weight2, bias, gamma, beta, True),
           atol=2e-2, rtol=2e-2)

    print("KERNEL_OK")
</pallas_src>

<mosaic_0001>
module attributes {stable_mosaic.version = 11 : i64} {
  func.func @_conv_folded_kernel(%arg0: i32, %arg1: i32, %arg2: i32, %arg3: memref<1x16x32x128xbf16, #tpu.memory_space<vmem>>, %arg4: memref<3x128x128xbf16, #tpu.memory_space<vmem>>, %arg5: memref<1x128xf32, #tpu.memory_space<vmem>>, %arg6: memref<1x16x16x128xf32, #tpu.memory_space<vmem>>) attributes {dimension_semantics = [#tpu.dimension_semantics<parallel>, #tpu.dimension_semantics<parallel>, #tpu.dimension_semantics<parallel>], iteration_bounds = array<i64: 2, 1, 1>, scalar_prefetch = 0 : i64, scratch_operands = 0 : i64, tpu.core_type = #tpu.core_type<tc>, window_params = [{transform_indices = @transform_0, window_bounds = array<i64: 1, 16, 32, 128>}, {transform_indices = @transform_1, window_bounds = array<i64: 3, 128, 128>}, {transform_indices = @transform_2, window_bounds = array<i64: 1, 128>}, {transform_indices = @transform_3, window_bounds = array<i64: 1, 16, 16, 128>}]} {
    %c0 = arith.constant 0 : index
    %c0_0 = arith.constant 0 : index
    %c0_1 = arith.constant 0 : index
    %c0_2 = arith.constant 0 : index
    %0 = vector.load %arg3[%c0, %c0_0, %c0_1, %c0_2] : memref<1x16x32x128xbf16, #tpu.memory_space<vmem>>, vector<1x16x32x128xbf16>
    %1 = vector.shape_cast %0 : vector<1x16x32x128xbf16> to vector<16x32x128xbf16>
    %2 = vector.shape_cast %1 : vector<16x32x128xbf16> to vector<512x128xbf16>
    %c0_3 = arith.constant 0 : index
    %c0_4 = arith.constant 0 : index
    %c0_5 = arith.constant 0 : index
    %3 = vector.load %arg4[%c0_3, %c0_4, %c0_5] : memref<3x128x128xbf16, #tpu.memory_space<vmem>>, vector<1x128x128xbf16>
    %4 = vector.shape_cast %3 : vector<1x128x128xbf16> to vector<128x128xbf16>
    %cst = arith.constant dense<0.000000e+00> : vector<512x128xf32>
    %5 = tpu.matmul %2, %4, %cst {dimension_numbers = #tpu.dot_dimension_numbers<[1], [0], [0], [1], [0, 0, 1, 1], [], []>} : vector<512x128xbf16>, vector<128x128xbf16>, vector<512x128xf32> -> vector<512x128xf32>
    %c0_6 = arith.constant 0 : index
    %c0_7 = arith.constant 0 : index
    %6 = vector.load %arg5[%c0_6, %c0_7] : memref<1x128xf32, #tpu.memory_space<vmem>>, vector<1x128xf32>
    %7 = vector.broadcast %6 : vector<1x128xf32> to vector<512x128xf32>
    %8 = arith.addf %5, %7 : vector<512x128xf32>
    %c1 = arith.constant 1 : index
    %c0_8 = arith.constant 0 : index
    %c0_9 = arith.constant 0 : index
    %9 = vector.load %arg4[%c1, %c0_8, %c0_9] : memref<3x128x128xbf16, #tpu.memory_space<vmem>>, vector<1x128x128xbf16>
    %10 = vector.shape_cast %9 : vector<1x128x128xbf16> to vector<128x128xbf16>
    %cst_10 = arith.constant dense<0.000000e+00> : vector<512x128xf32>
    %11 = tpu.matmul %2, %10, %cst_10 {dimension_numbers = #tpu.dot_dimension_numbers<[1], [0], [0], [1], [0, 0, 1, 1], [], []>} : vector<512x128xbf16>, vector<128x128xbf16>, vector<512x128xf32> -> vector<512x128xf32>
    %c511_i32 = arith.constant 511 : i32
    %12 = tpu.dynamic_rotate %11 by %c511_i32 dim 0 : vector<512x128xf32>, i32 -> vector<512x128xf32>
    %13 = arith.addf %8, %12 : vector<512x128xf32>
    %c2 = arith.constant 2 : index
    %c0_11 = arith.constant 0 : index
    %c0_12 = arith.constant 0 : index
    %14 = vector.load %arg4[%c2, %c0_11, %c0_12] : memref<3x128x128xbf16, #tpu.memory_space<vmem>>, vector<1x128x128xbf16>
    %15 = vector.shape_cast %14 : vector<1x128x128xbf16> to vector<128x128xbf16>
    %cst_13 = arith.constant dense<0.000000e+00> : vector<512x128xf32>
    %16 = tpu.matmul %2, %15, %cst_13 {dimension_numbers = #tpu.dot_dimension_numbers<[1], [0], [0], [1], [0, 0, 1, 1], [], []>} : vector<512x128xbf16>, vector<128x128xbf16>, vector<512x128xf32> -> vector<512x128xf32>
    %c510_i32 = arith.constant 510 : i32
    %17 = tpu.dynamic_rotate %16 by %c510_i32 dim 0 : vector<512x128xf32>, i32 -> vector<512x128xf32>
    %18 = arith.addf %13, %17 : vector<512x128xf32>
    %19 = vector.shape_cast %18 : vector<512x128xf32> to vector<16x32x128xf32>
    %20 = vector.extract_strided_slice %19 {offsets = [0, 0, 0], sizes = [16, 16, 128], strides = [1, 1, 1]} : vector<16x32x128xf32> to vector<16x16x128xf32>
    %cst_14 = arith.constant 0.000000e+00 : f32
    %21 = vector.broadcast %cst_14 : f32 to vector<16x16x128xf32>
    %22 = arith.maximumf %20, %21 : vector<16x16x128xf32>
    %c0_15 = arith.constant 0 : index
    %c0_16 = arith.constant 0 : index
    %c0_17 = arith.constant 0 : index
    %c0_18 = arith.constant 0 : index
    %23 = vector.load %arg6[%c0_15, %c0_16, %c0_17, %c0_18] : memref<1x16x16x128xf32, #tpu.memory_space<vmem>>, vector<1x16x16x128xf32>
    %24 = vector.shape_cast %23 : vector<1x16x16x128xf32> to vector<16x16x128xf32>
    %25 = vector.shape_cast %22 : vector<16x16x128xf32> to vector<1x16x16x128xf32>
    tpu.vector_store %arg6[%c0_15, %c0_16, %c0_17, %c0_18], %25 {strides = array<i32>} : memref<1x16x16x128xf32, #tpu.memory_space<vmem>>, vector<1x16x16x128xf32>,
    return
  }
  func.func @transform_0(%arg0: i32, %arg1: i32, %arg2: i32) -> (i32, i32, i32, i32) {
    %c0_i32 = arith.constant 0 : i32
    %c0_i32_0 = arith.constant 0 : i32
    %c0_i32_1 = arith.constant 0 : i32
    return %arg0, %arg1, %c0_i32, %c0_i32_0 : i32, i32, i32, i32
  }
  func.func @transform_1(%arg0: i32, %arg1: i32, %arg2: i32) -> (i32, i32, i32) {
    %c0_i32 = arith.constant 0 : i32
    %c0_i32_0 = arith.constant 0 : i32
    %c0_i32_1 = arith.constant 0 : i32
    return %c0_i32, %c0_i32_0, %arg2 : i32, i32, i32
  }
  func.func @transform_2(%arg0: i32, %arg1: i32, %arg2: i32) -> (i32, i32) {
    %c0_i32 = arith.constant 0 : i32
    %c0_i32_0 = arith.constant 0 : i32
    return %c0_i32, %arg2 : i32, i32
  }
  func.func @transform_3(%arg0: i32, %arg1: i32, %arg2: i32) -> (i32, i32, i32, i32) {
    %c0_i32 = arith.constant 0 : i32
    %c0_i32_0 = arith.constant 0 : i32
    return %arg0, %arg1, %c0_i32, %arg2 : i32, i32, i32, i32
  }
}

</mosaic_0001>

<llo_original>
// kernel: _lambda_.1
$region0: #{_lambda_.1}
  #allocation0 [shape = 'u32[]', space=smem, size = 0x4, offset = 0x4, fixed_abs, tag = 'smem constant byte address 0x4 - core index']
  #allocation1 [shape = 'u32[144,128]{1,0:T(1,128)}', space=vmem, size = 0x12000, scoped, tag = 'internal scratch']
  %s0 = inlined_call_operand.vmem [shape: bf16[2,16,32,128], index: 0, kind: input, shape index: {}]
  %s1 = inlined_call_operand.vmem [shape: bf16[3,128,128], index: 1, kind: input, shape index: {}]
  %s2 = inlined_call_operand.vmem [shape: f32[1,128], index: 2, kind: input, shape index: {}]
  %s3 = inlined_call_operand.vmem [shape: f32[2,16,16,128], index: 3, kind: output, shape index: {}]
  %s4 = sld [smem:[#allocation0]]
  $region45: #{_lambda_.1} parent=0
    _
  %s6 = ssub.s32 1, %s4
  %s7 = scalar_select 0, %s6, %s4
  loop: start=0, step=1, limit=4
  $region2: #{_lambda_.1} parent=0 // loop_pre_header
    _
  $region3: #{_lambda_.1} parent=0 // loop_header
    %s9 = sphi 0, %s13
    %p10 = scmp.ge.s32.totalorder %s9, 4
    %s16 = sphi 0, %s35
    %s17 = sphi 0, %s31
    %s18 = sphi 0, %s27
    %s19 = sphi 0, %s16
    %s20 = sphi 0, %s17
    %s21 = sphi 0, %s18
    %s22 = sphi 0, %s19
    %s23 = sphi 0, %s20
    %s24 = sphi 0, %s21
    %s40 = sphi 0, %s42
    %s43 = sphi 0, %s40
    %s44 = sphi 0, %s43
    %s60 = sphi 0, %s44
    %s66 = sphi 0, %s68
    %s69 = sphi 0, %s66
    %s70 = sphi 0, %s69
    %s86 = sphi 0, %s70
    %s92 = sphi 0, %s94
    %s95 = sphi 0, %s92
    %s96 = sphi 0, %s95
    %s112 = sphi 0, %s96
    %s122 = sphi 0, %s124
    %s125 = sphi 0, %s122
    %s126 = sphi 0, %s125
    %s142 = sphi 0, %s126
  $region4: #{_lambda_.1} parent=0 // loop_header_branch
    %12 = sbr.rel (%p10) target = $region8
  $region5: #{_lambda_.1} parent=0 // loop_body
    %s14 = ssub.s32 %s9, 1
    %s15 = ssub.s32 %s9, 2
    %s25 = sadd.s32 1, %s18
    %p26 = scmp.ge.s32.totalorder %s25, 1
    %s27 = scalar_select %p26, 0, %s25
    %s28 = sadd.s32 1, %s17
    %s29 = scalar_select %p26, %s28, %s17
    %p30 = scmp.ge.s32.totalorder %s29, 1
    %s31 = scalar_select %p30, 0, %s29
    %s32 = sadd.s32 1, %s16
    %s33 = scalar_select %p30, %s32, %s16
    %p34 = scmp.ge.s32.totalorder %s33, 2
    %s35 = scalar_select %p34, 0, %s33
    %s36 = ssub.s32 %s16, %s35
    %s37 = ssub.s32 %s17, %s31
    %s38 = sor.u32 %s36, %s37
    %p39 = scmp.eq.s32.totalorder %s38, 0
    %s41 = sadd.s32 %s40, 1
    %s42 = scalar_select %p39, %s40, %s41
    %p45 = pneg %p39
    %p46 = scmp.eq.s32.totalorder %s9, 1
    %p47 = por %p45, %p46
    %p48 = scmp.ne.s32.totalorder %s40, %s43
    %p49 = scmp.eq.s32.totalorder %s9, 0
    %p50 = por %p48, %p49
    %p51 = scmp.ne.s32.totalorder %s40, %s43
    %p52 = scmp.eq.s32.totalorder %s14, 1
    %p53 = por %p51, %p52
    %p54 = scmp.ne.s32.totalorder %s43, %s44
    %p55 = scmp.eq.s32.totalorder %s14, 0
    %p56 = por %p54, %p55
    %p57 = scmp.ne.s32.totalorder %s43, %s44
    %p58 = scmp.eq.s32.totalorder %s15, 1
    %p59 = por %p57, %p58
    %p61 = scmp.ne.s32.totalorder %s44, %s60
    %p62 = scmp.eq.s32.totalorder %s15, 0
    %p63 = por %p61, %p62
    %s64 = ssub.s32 %s18, %s27
    %p65 = scmp.eq.s32.totalorder %s64, 0
    %s67 = sadd.s32 %s66, 1
    %s68 = scalar_select %p65, %s66, %s67
    %p71 = pneg %p65
    %p72 = scmp.eq.s32.totalorder %s9, 1
    %p73 = por %p71, %p72
    %p74 = scmp.ne.s32.totalorder %s66, %s69
    %p75 = scmp.eq.s32.totalorder %s9, 0
    %p76 = por %p74, %p75
    %p77 = scmp.ne.s32.totalorder %s66, %s69
    %p78 = scmp.eq.s32.totalorder %s14, 1
    %p79 = por %p77, %p78
    %p80 = scmp.ne.s32.totalorder %s69, %s70
    %p81 = scmp.eq.s32.totalorder %s14, 0
    %p82 = por %p80, %p81
    %p83 = scmp.ne.s32.totalorder %s69, %s70
    %p84 = scmp.eq.s32.totalorder %s15, 1
    %p85 = por %p83, %p84
    %p87 = scmp.ne.s32.totalorder %s70, %s86
    %p88 = scmp.eq.s32.totalorder %s15, 0
    %p89 = por %p87, %p88
    %s90 = ssub.s32 %s18, %s27
    %p91 = scmp.eq.s32.totalorder %s90, 0
    %s93 = sadd.s32 %s92, 1
    %s94 = scalar_select %p91, %s92, %s93
    %p97 = pneg %p91
    %p98 = scmp.eq.s32.totalorder %s9, 1
    %p99 = por %p97, %p98
    %p100 = scmp.ne.s32.totalorder %s92, %s95
    %p101 = scmp.eq.s32.totalorder %s9, 0
    %p102 = por %p100, %p101
    %p103 = scmp.ne.s32.totalorder %s92, %s95
    %p104 = scmp.eq.s32.totalorder %s14, 1
    %p105 = por %p103, %p104
    %p106 = scmp.ne.s32.totalorder %s95, %s96
    %p107 = scmp.eq.s32.totalorder %s14, 0
    %p108 = por %p106, %p107
    %p109 = scmp.ne.s32.totalorder %s95, %s96
    %p110 = scmp.eq.s32.totalorder %s15, 1
    %p111 = por %p109, %p110
    %p113 = scmp.ne.s32.totalorder %s96, %s112
    %p114 = scmp.eq.s32.totalorder %s15, 0
    %p115 = por %p113, %p114
    %s116 = ssub.s32 %s16, %s35
    %s117 = ssub.s32 %s17, %s31
    %s118 = sor.u32 %s116, %s117
    %s119 = ssub.s32 %s18, %s27
    %s120 = sor.u32 %s118, %s119
    %p121 = scmp.eq.s32.totalorder %s120, 0
    %s123 = sadd.s32 %s122, 1
    %s124 = scalar_select %p121, %s122, %s123
    %p127 = pneg %p121
    %p128 = scmp.eq.s32.totalorder %s9, 1
    %p129 = por %p127, %p128
    %p130 = scmp.ne.s32.totalorder %s122, %s125
    %p131 = scmp.eq.s32.totalorder %s9, 0
    %p132 = por %p130, %p131
    %p133 = scmp.ne.s32.totalorder %s122, %s125
    %p134 = scmp.eq.s32.totalorder %s14, 1
    %p135 = por %p133, %p134
    %p136 = scmp.ne.s32.totalorder %s125, %s126
    %p137 = scmp.eq.s32.totalorder %s14, 0
    %p138 = por %p136, %p137
    %p139 = scmp.ne.s32.totalorder %s125, %s126
    %p140 = scmp.eq.s32.totalorder %s15, 1
    %p141 = por %p139, %p140
    %p143 = scmp.ne.s32.totalorder %s126, %s142
    %p144 = scmp.eq.s32.totalorder %s15, 0
    %p145 = por %p143, %p144
    %p146 = scmp.le.s32.totalorder 1, %s9
    %p147 = scmp.lt.s32.totalorder %s9, 3
    %p148 = pnand %p146, %p147
    %p149 = pneg %p148
    // Predicated region
    $region9: #{_lambda_.1} parent=5 // pred_check
      _
    $region10: #{_lambda_.1} parent=5 // pred_check_branch
      %151 = sbr.rel (%p148) target = $region12
    $region11: #{_lambda_.1} parent=5 // pred_region
      %s152 = ssub.s32 %s9, 1
      // Predicated region
      $region13: #{_lambda_.1} parent=11 // pred_check
        %p153 = pneg %p82
      $region14: #{_lambda_.1} parent=11 // pred_check_branch
        %155 = sbr.rel (%p153) target = $region16
      $region15: #{_lambda_.1} parent=11 // pred_region
        %p156 = scmp.lt.s32.totalorder %s21, 0
        %s157 = scalar_select %p156, %s21, 0
        %s158 = smul.addr %s157, 4
        %s159 = scalar_lea.vmem %s1, %s158
      $region16: #{_lambda_.1} parent=11 // pred_fallthru
        _
      // Predicated region
      $region17: #{_lambda_.1} parent=11 // pred_check
        %p160 = pneg %p108
      $region18: #{_lambda_.1} parent=11 // pred_check_branch
        %162 = sbr.rel (%p160) target = $region20
      $region19: #{_lambda_.1} parent=11 // pred_region
        %p163 = scmp.lt.s32.totalorder %s21, 0
        %s164 = scalar_select %p163, %s21, 0
        %s165 = scalar_lea.vmem %s2, %s164
      $region20: #{_lambda_.1} parent=11 // pred_fallthru
        _
    $region12: #{_lambda_.1} parent=5 // pred_fallthru
      _
    %p166 = scmp.lt.s32.totalorder %s9, 2
    // Predicated region
    $region21: #{_lambda_.1} parent=5 // pred_check
      %p167 = pneg %p166
    $region22: #{_lambda_.1} parent=5 // pred_check_branch
      %169 = sbr.rel (%p167) target = $region24
    $region23: #{_lambda_.1} parent=5 // pred_region
      // Predicated region
      $region25: #{_lambda_.1} parent=23 // pred_check
        %p170 = pneg %p50
      $region26: #{_lambda_.1} parent=23 // pred_check_branch
        %172 = sbr.rel (%p170) target = $region28
      $region27: #{_lambda_.1} parent=23 // pred_region
        %s173 = smul.u32 16, %s17
        %p174 = scmp.lt.s32.totalorder %s16, 1
        %s175 = scalar_select %p174, %s16, 1
        %p176 = scmp.lt.s32.totalorder %s173, 15
        %s177 = scalar_select %p176, %s173, 15
        %s178 = smul.addr %s177, 4
        %s179 = smul.addr %s175, 64
        %s180 = sadd.s32 %s178, %s179
        %s181 = smul.addr %s180, 4
        %s182 = scalar_lea.vmem %s0, %s181
        %s183 = smul.u32 16, %s17
      $region28: #{_lambda_.1} parent=23 // pred_fallthru
        _
    $region24: #{_lambda_.1} parent=5 // pred_fallthru
      _
    %p184 = scmp.le.s32.totalorder 1, %s9
    %p185 = scmp.lt.s32.totalorder %s9, 3
    %p186 = pnand %p184, %p185
    %p187 = pneg %p186
    // Predicated region
    $region29: #{_lambda_.1} parent=5 // pred_check
      _
    $region30: #{_lambda_.1} parent=5 // pred_check_branch
      %189 = sbr.rel (%p186) target = $region32
    $region31: #{_lambda_.1} parent=5 // pred_region
      %s190 = ssub.s32 %s9, 1
      %s191 = smul.u32 16, %s20
      %p192 = scmp.lt.s32.totalorder %s19, 1
      %s193 = scalar_select %p192, %s19, 1
      %p194 = scmp.lt.s32.totalorder %s191, 15
      %s195 = scalar_select %p194, %s191, 15
      %s196 = smul.addr %s195, 4
      %s197 = smul.addr %s193, 64
      %s198 = sadd.s32 %s196, %s197
      %s199 = smul.addr %s198, 4
      %s200 = scalar_lea.vmem %s0, %s199
      %p201 = pneg %p56
      %p202 = pneg %p53
      %p203 = scmp.lt.s32.totalorder %s21, 0
      %s204 = scalar_select %p203, %s21, 0
      %s205 = smul.addr %s204, 4
      %s206 = scalar_lea.vmem %s1, %s205
      %p207 = pneg %p82
      %p208 = pneg %p79
      %p209 = scmp.lt.s32.totalorder %s21, 0
      %s210 = scalar_select %p209, %s21, 0
      %s211 = scalar_lea.vmem %s2, %s210
      %p212 = pneg %p108
      %p213 = pneg %p105
      %p214 = pneg %p138
      %p215 = pneg %p135
      %s216 = smul.u32 16, %s20
      %p217 = scmp.lt.s32.totalorder %s19, 1
      %s218 = scalar_select %p217, %s19, 1
      %p219 = scmp.lt.s32.totalorder %s216, 15
      %s220 = scalar_select %p219, %s216, 15
      %p221 = scmp.lt.s32.totalorder %s21, 0
      %s222 = scalar_select %p221, %s21, 0
      %s223 = smul.addr %s220, 2
      %s224 = sadd.s32 %s222, %s223
      %s225 = smul.addr %s218, 32
      %s226 = sadd.s32 %s224, %s225
      %s227 = smul.addr %s226, 8
      %s228 = scalar_lea.vmem %s3, %s227
      %s229 = smul.u32 16, %s20
      %p230 = scmp.lt.s32.totalorder %s19, 1
      %s231 = scalar_select %p230, %s19, 1
      %p232 = scmp.lt.s32.totalorder %s229, 15
      %s233 = scalar_select %p232, %s229, 15
      %s234 = smul.addr %s233, 4
      %s235 = smul.addr %s231, 64
      %s236 = sadd.s32 %s234, %s235
      %s237 = smul.addr %s236, 4
      %s238 = scalar_lea.vmem %s0, %s237
      %s239 = smul.u32 16, %s20
      %p240 = scmp.lt.s32.totalorder %s21, 0
      %s241 = scalar_select %p240, %s21, 0
      %s242 = smul.addr %s241, 4
      %s243 = scalar_lea.vmem %s1, %s242
      %p244 = scmp.lt.s32.totalorder %s21, 0
      %s245 = scalar_select %p244, %s21, 0
      %s246 = scalar_lea.vmem %s2, %s245
      %s247 = smul.u32 16, %s20
      %p248 = scmp.lt.s32.totalorder %s19, 1
      %s249 = scalar_select %p248, %s19, 1
      %p250 = scmp.lt.s32.totalorder %s247, 15
      %s251 = scalar_select %p250, %s247, 15
      %p252 = scmp.lt.s32.totalorder %s21, 0
      %s253 = scalar_select %p252, %s21, 0
      %s254 = smul.addr %s251, 2
      %s255 = sadd.s32 %s253, %s254
      %s256 = smul.addr %s249, 32
      %s257 = sadd.s32 %s255, %s256
      %s258 = smul.addr %s257, 8
      %s259 = scalar_lea.vmem %s3, %s258
      %s260 = smul.u32 16, %s20
      %v262 = vld [vmem:[%s238] sm:$0xf]
      %v263 = vld [vmem:[%s238 + $0x4] sm:$0xf]
      %v264 = vld [vmem:[%s238 + $0x8] sm:$0xf]
      %v265 = vld [vmem:[%s238 + $0xc] sm:$0xf]
      %v266 = vld [vmem:[%s238 + $0x10] sm:$0xf]
      %v267 = vld [vmem:[%s238 + $0x14] sm:$0xf]
      %v268 = vld [vmem:[%s238 + $0x18] sm:$0xf]
      %v269 = vld [vmem:[%s238 + $0x1c] sm:$0xf]
      %v270 = vld [vmem:[%s238 + $0x20] sm:$0xf]
      %v271 = vld [vmem:[%s238 + $0x24] sm:$0xf]
      %v272 = vld [vmem:[%s238 + $0x28] sm:$0xf]
      %v273 = vld [vmem:[%s238 + $0x2c] sm:$0xf]
      %v274 = vld [vmem:[%s238 + $0x30] sm:$0xf]
      %v275 = vld [vmem:[%s238 + $0x34] sm:$0xf]
      %v276 = vld [vmem:[%s238 + $0x38] sm:$0xf]
      %v277 = vld [vmem:[%s238 + $0x3c] sm:$0xf]
      %v278 = vld [vmem:[%s238 + $0x40] sm:$0xf]
      %v279 = vld [vmem:[%s238 + $0x44] sm:$0xf]
      %v280 = vld [vmem:[%s238 + $0x48] sm:$0xf]
      %v281 = vld [vmem:[%s238 + $0x4c] sm:$0xf]
      %v282 = vld [vmem:[%s238 + $0x50] sm:$0xf]
      %v283 = vld [vmem:[%s238 + $0x54] sm:$0xf]
      %v284 = vld [vmem:[%s238 + $0x58] sm:$0xf]
      %v285 = vld [vmem:[%s238 + $0x5c] sm:$0xf]
      %v286 = vld [vmem:[%s238 + $0x60] sm:$0xf]
      %v287 = vld [vmem:[%s238 + $0x64] sm:$0xf]
      %v288 = vld [vmem:[%s238 + $0x68] sm:$0xf]
      %v289 = vld [vmem:[%s238 + $0x6c] sm:$0xf]
      %v290 = vld [vmem:[%s238 + $0x70] sm:$0xf]
      %v291 = vld [vmem:[%s238 + $0x74] sm:$0xf]
      %v292 = vld [vmem:[%s238 + $0x78] sm:$0xf]
      %v293 = vld [vmem:[%s238 + $0x7c] sm:$0xf]
      %v294 = vld [vmem:[%s238 + $0x80] sm:$0xf]
      %v295 = vld [vmem:[%s238 + $0x84] sm:$0xf]
      %v296 = vld [vmem:[%s238 + $0x88] sm:$0xf]
      %v297 = vld [vmem:[%s238 + $0x8c] sm:$0xf]
      %v298 = vld [vmem:[%s238 + $0x90] sm:$0xf]
      %v299 = vld [vmem:[%s238 + $0x94] sm:$0xf]
      %v300 = vld [vmem:[%s238 + $0x98] sm:$0xf]
      %v301 = vld [vmem:[%s238 + $0x9c] sm:$0xf]
      %v302 = vld [vmem:[%s238 + $0xa0] sm:$0xf]
      %v303 = vld [vmem:[%s238 + $0xa4] sm:$0xf]
      %v304 = vld [vmem:[%s238 + $0xa8] sm:$0xf]
      %v305 = vld [vmem:[%s238 + $0xac] sm:$0xf]
      %v306 = vld [vmem:[%s238 + $0xb0] sm:$0xf]
      %v307 = vld [vmem:[%s238 + $0xb4] sm:$0xf]
      %v308 = vld [vmem:[%s238 + $0xb8] sm:$0xf]
      %v309 = vld [vmem:[%s238 + $0xbc] sm:$0xf]
      %v310 = vld [vmem:[%s238 + $0xc0] sm:$0xf]
      %v311 = vld [vmem:[%s238 + $0xc4] sm:$0xf]
      %v312 = vld [vmem:[%s238 + $0xc8] sm:$0xf]
      %v313 = vld [vmem:[%s238 + $0xcc] sm:$0xf]
      %v314 = vld [vmem:[%s238 + $0xd0] sm:$0xf]
      %v315 = vld [vmem:[%s238 + $0xd4] sm:$0xf]
      %v316 = vld [vmem:[%s238 + $0xd8] sm:$0xf]
      %v317 = vld [vmem:[%s238 + $0xdc] sm:$0xf]
      %v318 = vld [vmem:[%s238 + $0xe0] sm:$0xf]
      %v319 = vld [vmem:[%s238 + $0xe4] sm:$0xf]
      %v320 = vld [vmem:[%s238 + $0xe8] sm:$0xf]
      %v321 = vld [vmem:[%s238 + $0xec] sm:$0xf]
      %v322 = vld [vmem:[%s238 + $0xf0] sm:$0xf]
      %v323 = vld [vmem:[%s238 + $0xf4] sm:$0xf]
      %v324 = vld [vmem:[%s238 + $0xf8] sm:$0xf]
      %v325 = vld [vmem:[%s238 + $0xfc] sm:$0xf]
      %v326 = vld [vmem:[%s243] sm:$0xf]
      %v327 = vld [vmem:[%s243 + $0x4] sm:$0xf]
      %v328 = vld [vmem:[%s243 + $0x8] sm:$0xf]
      %v329 = vld [vmem:[%s243 + $0xc] sm:$0xf]
      %v330 = vld [vmem:[%s243 + $0x10] sm:$0xf]
      %v331 = vld [vmem:[%s243 + $0x14] sm:$0xf]
      %v332 = vld [vmem:[%s243 + $0x18] sm:$0xf]
      %v333 = vld [vmem:[%s243 + $0x1c] sm:$0xf]
      %v334 = vld [vmem:[%s243 + $0x20] sm:$0xf]
      %v335 = vld [vmem:[%s243 + $0x24] sm:$0xf]
      %v336 = vld [vmem:[%s243 + $0x28] sm:$0xf]
      %v337 = vld [vmem:[%s243 + $0x2c] sm:$0xf]
      %v338 = vld [vmem:[%s243 + $0x30] sm:$0xf]
      %v339 = vld [vmem:[%s243 + $0x34] sm:$0xf]
      %v340 = vld [vmem:[%s243 + $0x38] sm:$0xf]
      %v341 = vld [vmem:[%s243 + $0x3c] sm:$0xf]
      %v342 = vld [vmem:[%s246] sm:$0x1]
      %v344 = vlaneseq
      %v345 = vshrl.u32 %v344, 7
      %v346 = vsub.s32 0, %v345
      %v347 = vrot.slane %v342, %v346
      %v413 = vunpack.c.l.b16 %v262
      %v414 = vunpack.c.l.b16 %v263
      %v415 = vunpack.c.l.b16 %v264
      %v416 = vunpack.c.l.b16 %v265
      %v417 = vunpack.c.l.b16 %v266
      %v418 = vunpack.c.l.b16 %v267
      %v419 = vunpack.c.l.b16 %v268
      %v420 = vunpack.c.l.b16 %v269
      %v421 = vunpack.c.l.b16 %v270
      %v422 = vunpack.c.l.b16 %v271
      %v423 = vunpack.c.l.b16 %v272
      %v424 = vunpack.c.l.b16 %v273
      %v425 = vunpack.c.l.b16 %v274
      %v426 = vunpack.c.l.b16 %v275
      %v427 = vunpack.c.l.b16 %v276
      %v428 = vunpack.c.l.b16 %v277
      %v429 = vunpack.c.l.b16 %v278
      %v430 = vunpack.c.l.b16 %v279
      %v431 = vunpack.c.l.b16 %v280
      %v432 = vunpack.c.l.b16 %v281
      %v433 = vunpack.c.l.b16 %v282
      %v434 = vunpack.c.l.b16 %v283
      %v435 = vunpack.c.l.b16 %v284
      %v436 = vunpack.c.l.b16 %v285
      %v437 = vunpack.c.l.b16 %v286
      %v438 = vunpack.c.l.b16 %v287
      %v439 = vunpack.c.l.b16 %v288
      %v440 = vunpack.c.l.b16 %v289
      %v441 = vunpack.c.l.b16 %v290
      %v442 = vunpack.c.l.b16 %v291
      %v443 = vunpack.c.l.b16 %v292
      %v444 = vunpack.c.l.b16 %v293
      %v445 = vunpack.c.l.b16 %v294
      %v446 = vunpack.c.l.b16 %v295
      %v447 = vunpack.c.l.b16 %v296
      %v448 = vunpack.c.l.b16 %v297
      %v449 = vunpack.c.l.b16 %v298
      %v450 = vunpack.c.l.b16 %v299
      %v451 = vunpack.c.l.b16 %v300
      %v452 = vunpack.c.l.b16 %v301
      %v453 = vunpack.c.l.b16 %v302
      %v454 = vunpack.c.l.b16 %v303
      %v455 = vunpack.c.l.b16 %v304
      %v456 = vunpack.c.l.b16 %v305
      %v457 = vunpack.c.l.b16 %v306
      %v458 = vunpack.c.l.b16 %v307
      %v459 = vunpack.c.l.b16 %v308
      %v460 = vunpack.c.l.b16 %v309
      %v461 = vunpack.c.l.b16 %v310
      %v462 = vunpack.c.l.b16 %v311
      %v463 = vunpack.c.l.b16 %v312
      %v464 = vunpack.c.l.b16 %v313
      %v465 = vunpack.c.l.b16 %v314
      %v466 = vunpack.c.l.b16 %v315
      %v467 = vunpack.c.l.b16 %v316
      %v468 = vunpack.c.l.b16 %v317
      %v469 = vunpack.c.l.b16 %v318
      %v470 = vunpack.c.l.b16 %v319
      %v471 = vunpack.c.l.b16 %v320
      %v472 = vunpack.c.l.b16 %v321
      %v473 = vunpack.c.l.b16 %v322
      %v474 = vunpack.c.l.b16 %v323
      %v475 = vunpack.c.l.b16 %v324
      %v476 = vunpack.c.l.b16 %v325
      %v477 = vpack.c.b16 %v414, %v413
      %v478 = vpack.c.b16 %v416, %v415
      %v479 = vpack.c.b16 %v418, %v417
      %v480 = vpack.c.b16 %v420, %v419
      %v481 = vpack.c.b16 %v422, %v421
      %v482 = vpack.c.b16 %v424, %v423
      %v483 = vpack.c.b16 %v426, %v425
      %v484 = vpack.c.b16 %v428, %v427
      %v485 = vpack.c.b16 %v430, %v429
      %v486 = vpack.c.b16 %v432, %v431
      %v487 = vpack.c.b16 %v434, %v433
      %v488 = vpack.c.b16 %v436, %v435
      %v489 = vpack.c.b16 %v438, %v437
      %v490 = vpack.c.b16 %v440, %v439
      %v491 = vpack.c.b16 %v442, %v441
      %v492 = vpack.c.b16 %v444, %v443
      %v493 = vpack.c.b16 %v446, %v445
      %v494 = vpack.c.b16 %v448, %v447
      %v495 = vpack.c.b16 %v450, %v449
      %v496 = vpack.c.b16 %v452, %v451
      %v497 = vpack.c.b16 %v454, %v453
      %v498 = vpack.c.b16 %v456, %v455
      %v499 = vpack.c.b16 %v458, %v457
      %v500 = vpack.c.b16 %v460, %v459
      %v501 = vpack.c.b16 %v462, %v461
      %v502 = vpack.c.b16 %v464, %v463
      %v503 = vpack.c.b16 %v466, %v465
      %v504 = vpack.c.b16 %v468, %v467
      %v505 = vpack.c.b16 %v470, %v469
      %v506 = vpack.c.b16 %v472, %v471
      %v507 = vpack.c.b16 %v474, %v473
      %v508 = vpack.c.b16 %v476, %v475
      %v557 = vunpack.c.l.b16 %v326
      %v558 = vunpack.c.l.b16 %v327
      %v559 = vunpack.c.l.b16 %v328
      %v560 = vunpack.c.l.b16 %v329
      %v561 = vunpack.c.l.b16 %v330
      %v562 = vunpack.c.l.b16 %v331
      %v563 = vunpack.c.l.b16 %v332
      %v564 = vunpack.c.l.b16 %v333
      %v565 = vunpack.c.l.b16 %v334
      %v566 = vunpack.c.l.b16 %v335
      %v567 = vunpack.c.l.b16 %v336
      %v568 = vunpack.c.l.b16 %v337
      %v569 = vunpack.c.l.b16 %v338
      %v570 = vunpack.c.l.b16 %v339
      %v571 = vunpack.c.l.b16 %v340
      %v572 = vunpack.c.l.b16 %v341
      %v573 = vpack.c.b16 %v558, %v557
      %v574 = vpack.c.b16 %v560, %v559
      %v575 = vpack.c.b16 %v562, %v561
      %v576 = vpack.c.b16 %v564, %v563
      %v577 = vpack.c.b16 %v566, %v565
      %v578 = vpack.c.b16 %v568, %v567
      %v579 = vpack.c.b16 %v570, %v569
      %v580 = vpack.c.b16 %v572, %v571
      %589 = vmatprep.subr.bf16.mxu0 0
      %590 = vmatpush1.bf16.msra.mxu0 %v573
      %591 = vmatprep.subr.bf16.mxu0 0
      %592 = vmatpush1.bf16.msra.mxu0 %v574
      %593 = vmatprep.subr.bf16.mxu0 0
      %594 = vmatpush1.bf16.msra.mxu0 %v575
      %595 = vmatprep.subr.bf16.mxu0 0
      %596 = vmatpush1.bf16.msra.mxu0 %v576
      %597 = vmatprep.subr.bf16.mxu0 0
      %598 = vmatpush1.bf16.msra.mxu0 %v577
      %599 = vmatprep.subr.bf16.mxu0 0
      %600 = vmatpush1.bf16.msra.mxu0 %v578
      %601 = vmatprep.subr.bf16.mxu0 0
      %602 = vmatpush1.bf16.msra.mxu0 %v579
      %603 = vmatprep.subr.bf16.mxu0 0
      %604 = vmatpush1.bf16.msra.mxu0 %v580
      %605 = vmatprep.subr.bf16.mxu0 0
      %606 = vmatpush1.bf16.msra.mxu0 0
      %607 = vmatprep.subr.bf16.mxu0 0
      %608 = vmatpush1.bf16.msra.mxu0 0
      %609 = vmatprep.subr.bf16.mxu0 0
      %610 = vmatpush1.bf16.msra.mxu0 0
      %611 = vmatprep.subr.bf16.mxu0 0
      %612 = vmatpush1.bf16.msra.mxu0 0
      %613 = vmatprep.subr.bf16.mxu0 0
      %614 = vmatpush1.bf16.msra.mxu0 0
      %615 = vmatprep.subr.bf16.mxu0 0
      %616 = vmatpush1.bf16.msra.mxu0 0
      %617 = vmatprep.subr.bf16.mxu0 0
      %618 = vmatpush1.bf16.msra.mxu0 0
      %619 = vmatprep.subr.bf16.mxu0 0
      %620 = vmatpush1.bf16.msra.mxu0 0
      %621 = vmatprep.mubr.bf16.mxu0 0
      %622 = vmatmul.mubr.bf16.gmra.mrb[0].mxu0 %v477
      %v623 = vpop.f32.mrb[0].mxu0
      %v624 = vadd.f32 %v347, %v623
      %v625 = vpop.f32.mrb[0].mxu0
      %v626 = vpop.f32.mrb[0].mxu0
      %v627 = vadd.f32 %v347, %v626
      %v628 = vpop.f32.mrb[0].mxu0
      %629 = vmatprep.mubr.bf16.mxu0 0
      %630 = vmatmul.mubr.bf16.gmra.mrb[0].mxu0 %v478
      %v631 = vpop.f32.mrb[0].mxu0
      %v632 = vpop.f32.mrb[0].mxu0
      %v633 = vpop.f32.mrb[0].mxu0
      %v634 = vpop.f32.mrb[0].mxu0
      %635 = vmatprep.mubr.bf16.mxu0 0
      %636 = vmatmul.mubr.bf16.gmra.mrb[0].mxu0 %v479
      %v637 = vpop.f32.mrb[0].mxu0
      %v638 = vadd.f32 %v347, %v637
      %v639 = vpop.f32.mrb[0].mxu0
      %v640 = vpop.f32.mrb[0].mxu0
      %v641 = vadd.f32 %v347, %v640
      %v642 = vpop.f32.mrb[0].mxu0
      %643 = vmatprep.mubr.bf16.mxu0 0
      %644 = vmatmul.mubr.bf16.gmra.mrb[0].mxu0 %v480
      %v645 = vpop.f32.mrb[0].mxu0
      %v646 = vpop.f32.mrb[0].mxu0
      %v647 = vpop.f32.mrb[0].mxu0
      %v648 = vpop.f32.mrb[0].mxu0
      %649 = vmatprep.mubr.bf16.mxu0 0
      %650 = vmatmul.mubr.bf16.gmra.mrb[0].mxu0 %v481
      %v651 = vpop.f32.mrb[0].mxu0
      %v652 = vadd.f32 %v347, %v651
      %v653 = vpop.f32.mrb[0].mxu0
      %v654 = vpop.f32.mrb[0].mxu0
      %v655 = vadd.f32 %v347, %v654
      %v656 = vpop.f32.mrb[0].mxu0
      %657 = vmatprep.mubr.bf16.mxu0 0
      %658 = vmatmul.mubr.bf16.gmra.mrb[0].mxu0 %v482
      %v659 = vpop.f32.mrb[0].mxu0
      %v660 = vpop.f32.mrb[0].mxu0
      %v661 = vpop.f32.mrb[0].mxu0
      %v662 = vpop.f32.mrb[0].mxu0
      %663 = vmatprep.mubr.bf16.mxu0 0
      %664 = vmatmul.mubr.bf16.gmra.mrb[0].mxu0 %v483
      %v665 = vpop.f32.mrb[0].mxu0
      %v666 = vadd.f32 %v347, %v665
      %v667 = vpop.f32.mrb[0].mxu0
      %v668 = vpop.f32.mrb[0].mxu0
      %v669 = vadd.f32 %v347, %v668
      %v670 = vpop.f32.mrb[0].mxu0
      %671 = vmatprep.mubr.bf16.mxu0 0
      %672 = vmatmul.mubr.bf16.gmra.mrb[0].mxu0 %v484
      %v673 = vpop.f32.mrb[0].mxu0
      %v674 = vpop.f32.mrb[0].mxu0
      %v675 = vpop.f32.mrb[0].mxu0
      %v676 = vpop.f32.mrb[0].mxu0
      %677 = vmatprep.mubr.bf16.mxu0 0
      %678 = vmatmul.mubr.bf16.gmra.mrb[0].mxu0 %v485
      %v679 = vpop.f32.mrb[0].mxu0
      %v680 = vadd.f32 %v347, %v679
      %v681 = vpop.f32.mrb[0].mxu0
      %v682 = vpop.f32.mrb[0].mxu0
      %v683 = vadd.f32 %v347, %v682
      %v684 = vpop.f32.mrb[0].mxu0
      %685 = vmatprep.mubr.bf16.mxu0 0
      %686 = vmatmul.mubr.bf16.gmra.mrb[0].mxu0 %v486
      %v687 = vpop.f32.mrb[0].mxu0
      %v688 = vpop.f32.mrb[0].mxu0
      %v689 = vpop.f32.mrb[0].mxu0
      %v690 = vpop.f32.mrb[0].mxu0
      %691 = vmatprep.mubr.bf16.mxu0 0
      %692 = vmatmul.mubr.bf16.gmra.mrb[0].mxu0 %v487
      %v693 = vpop.f32.mrb[0].mxu0
      %v694 = vadd.f32 %v347, %v693
      %v695 = vpop.f32.mrb[0].mxu0
      %v696 = vpop.f32.mrb[0].mxu0
      %v697 = vadd.f32 %v347, %v696
      %v698 = vpop.f32.mrb[0].mxu0
      %699 = vmatprep.mubr.bf16.mxu0 0
      %700 = vmatmul.mubr.bf16.gmra.mrb[0].mxu0 %v488
      %v701 = vpop.f32.mrb[0].mxu0
      %v702 = vpop.f32.mrb[0].mxu0
      %v703 = vpop.f32.mrb[0].mxu0
      %v704 = vpop.f32.mrb[0].mxu0
      %705 = vmatprep.mubr.bf16.mxu0 0
      %706 = vmatmul.mubr.bf16.gmra.mrb[0].mxu0 %v489
      %v707 = vpop.f32.mrb[0].mxu0
      %v708 = vadd.f32 %v347, %v707
      %v709 = vpop.f32.mrb[0].mxu0
      %v710 = vpop.f32.mrb[0].mxu0
      %v711 = vadd.f32 %v347, %v710
      %v712 = vpop.f32.mrb[0].mxu0
      %713 = vmatprep.mubr.bf16.mxu0 0
      %714 = vmatmul.mubr.bf16.gmra.mrb[0].mxu0 %v490
      %v715 = vpop.f32.mrb[0].mxu0
      %v716 = vpop.f32.mrb[0].mxu0
      %v717 = vpop.f32.mrb[0].mxu0
      %v718 = vpop.f32.mrb[0].mxu0
      %719 = vmatprep.mubr.bf16.mxu0 0
      %720 = vmatmul.mubr.bf16.gmra.mrb[0].mxu0 %v491
      %v721 = vpop.f32.mrb[0].mxu0
      %v722 = vadd.f32 %v347, %v721
      %v723 = vpop.f32.mrb[0].mxu0
      %v724 = vpop.f32.mrb[0].mxu0
      %v725 = vadd.f32 %v347, %v724
      %v726 = vpop.f32.mrb[0].mxu0
      %727 = vmatprep.mubr.bf16.mxu0 0
      %728 = vmatmul.mubr.bf16.gmra.mrb[0].mxu0 %v492
      %v729 = vpop.f32.mrb[0].mxu0
      %v730 = vpop.f32.mrb[0].mxu0
      %v731 = vpop.f32.mrb[0].mxu0
      %v732 = vpop.f32.mrb[0].mxu0
      %733 = vmatprep.mubr.bf16.mxu0 0
      %734 = vmatmul.mubr.bf16.gmra.mrb[0].mxu0 %v493
      %v735 = vpop.f32.mrb[0].mxu0
      %v736 = vadd.f32 %v347, %v735
      %v737 = vpop.f32.mrb[0].mxu0
      %v738 = vpop.f32.mrb[0].mxu0
      %v739 = vadd.f32 %v347, %v738
      %v740 = vpop.f32.mrb[0].mxu0
      %741 = vmatprep.mubr.bf16.mxu0 0
      %742 = vmatmul.mubr.bf16.gmra.mrb[0].mxu0 %v494
      %v743 = vpop.f32.mrb[0].mxu0
      %v744 = vpop.f32.mrb[0].mxu0
      %v745 = vpop.f32.mrb[0].mxu0
      %v746 = vpop.f32.mrb[0].mxu0
      %747 = vmatprep.mubr.bf16.mxu0 0
      %748 = vmatmul.mubr.bf16.gmra.mrb[0].mxu0 %v495
      %v749 = vpop.f32.mrb[0].mxu0
      %v750 = vadd.f32 %v347, %v749
      %v751 = vpop.f32.mrb[0].mxu0
      %v752 = vpop.f32.mrb[0].mxu0
      %v753 = vadd.f32 %v347, %v752
      %v754 = vpop.f32.mrb[0].mxu0
      %755 = vmatprep.mubr.bf16.mxu0 0
      %756 = vmatmul.mubr.bf16.gmra.mrb[0].mxu0 %v496
      %v757 = vpop.f32.mrb[0].mxu0
      %v758 = vpop.f32.mrb[0].mxu0
      %v759 = vpop.f32.mrb[0].mxu0
      %v760 = vpop.f32.mrb[0].mxu0
      %761 = vmatprep.mubr.bf16.mxu0 0
      %762 = vmatmul.mubr.bf16.gmra.mrb[0].mxu0 %v497
      %v763 = vpop.f32.mrb[0].mxu0
      %v764 = vadd.f32 %v347, %v763
      %v765 = vpop.f32.mrb[0].mxu0
      %v766 = vpop.f32.mrb[0].mxu0
      %v767 = vadd.f32 %v347, %v766
      %v768 = vpop.f32.mrb[0].mxu0
      %769 = vmatprep.mubr.bf16.mxu0 0
      %770 = vmatmul.mubr.bf16.gmra.mrb[0].mxu0 %v498
      %v771 = vpop.f32.mrb[0].mxu0
      %v772 = vpop.f32.mrb[0].mxu0
      %v773 = vpop.f32.mrb[0].mxu0
      %v774 = vpop.f32.mrb[0].mxu0
      %775 = vmatprep.mubr.bf16.mxu0 0
      %776 = vmatmul.mubr.bf16.gmra.mrb[0].mxu0 %v499
      %v777 = vpop.f32.mrb[0].mxu0
      %v778 = vadd.f32 %v347, %v777
      %v779 = vpop.f32.mrb[0].mxu0
      %v780 = vpop.f32.mrb[0].mxu0
      %v781 = vadd.f32 %v347, %v780
      %v782 = vpop.f32.mrb[0].mxu0
      %783 = vmatprep.mubr.bf16.mxu0 0
      %784 = vmatmul.mubr.bf16.gmra.mrb[0].mxu0 %v500
      %v785 = vpop.f32.mrb[0].mxu0
      %v786 = vpop.f32.mrb[0].mxu0
      %v787 = vpop.f32.mrb[0].mxu0
      %v788 = vpop.f32.mrb[0].mxu0
      %789 = vmatprep.mubr.bf16.mxu0 0
      %790 = vmatmul.mubr.bf16.gmra.mrb[0].mxu0 %v501
      %v791 = vpop.f32.mrb[0].mxu0
      %v792 = vadd.f32 %v347, %v791
      %v793 = vpop.f32.mrb[0].mxu0
      %v794 = vpop.f32.mrb[0].mxu0
      %v795 = vadd.f32 %v347, %v794
      %v796 = vpop.f32.mrb[0].mxu0
      %797 = vmatprep.mubr.bf16.mxu0 0
      %798 = vmatmul.mubr.bf16.gmra.mrb[0].mxu0 %v502
      %v799 = vpop.f32.mrb[0].mxu0
      %v800 = vpop.f32.mrb[0].mxu0
      %v801 = vpop.f32.mrb[0].mxu0
      %v802 = vpop.f32.mrb[0].mxu0
      %803 = vmatprep.mubr.bf16.mxu0 0
      %804 = vmatmul.mubr.bf16.gmra.mrb[0].mxu0 %v503
      %v805 = vpop.f32.mrb[0].mxu0
      %v806 = vadd.f32 %v347, %v805
      %v807 = vpop.f32.mrb[0].mxu0
      %v808 = vpop.f32.mrb[0].mxu0
      %v809 = vadd.f32 %v347, %v808
      %v810 = vpop.f32.mrb[0].mxu0
      %811 = vmatprep.mubr.bf16.mxu0 0
      %812 = vmatmul.mubr.bf16.gmra.mrb[0].mxu0 %v504
      %v813 = vpop.f32.mrb[0].mxu0
      %v814 = vpop.f32.mrb[0].mxu0
      %v815 = vpop.f32.mrb[0].mxu0
      %v816 = vpop.f32.mrb[0].mxu0
      %817 = vmatprep.mubr.bf16.mxu0 0
      %818 = vmatmul.mubr.bf16.gmra.mrb[0].mxu0 %v505
      %v819 = vpop.f32.mrb[0].mxu0
      %v820 = vadd.f32 %v347, %v819
      %v821 = vpop.f32.mrb[0].mxu0
      %v822 = vpop.f32.mrb[0].mxu0
      %v823 = vadd.f32 %v347, %v822
      %v824 = vpop.f32.mrb[0].mxu0
      %825 = vmatprep.mubr.bf16.mxu0 0
      %826 = vmatmul.mubr.bf16.gmra.mrb[0].mxu0 %v506
      %v827 = vpop.f32.mrb[0].mxu0
      %v828 = vpop.f32.mrb[0].mxu0
      %v829 = vpop.f32.mrb[0].mxu0
      %v830 = vpop.f32.mrb[0].mxu0
      %831 = vmatprep.mubr.bf16.mxu0 0
      %832 = vmatmul.mubr.bf16.gmra.mrb[0].mxu0 %v507
      %v833 = vpop.f32.mrb[0].mxu0
      %v834 = vadd.f32 %v347, %v833
      %v835 = vpop.f32.mrb[0].mxu0
      %v836 = vpop.f32.mrb[0].mxu0
      %v837 = vadd.f32 %v347, %v836
      %v838 = vpop.f32.mrb[0].mxu0
      %839 = vmatprep.mubr.bf16.mxu0 0
      %840 = vmatmul.mubr.bf16.gmra.mrb[0].mxu0 %v508
      %v841 = vpop.f32.mrb[0].mxu0
      %v842 = vpop.f32.mrb[0].mxu0
      %v843 = vpop.f32.mrb[0].mxu0
      %v844 = vpop.f32.mrb[0].mxu0
      %845 = vdwg.mxu0
      %s846 = scalar_lea.vmem %s243, 64
      %v847 = vld [vmem:[%s846] sm:$0xf]
      %v848 = vld [vmem:[%s846 + $0x4] sm:$0xf]
      %v849 = vld [vmem:[%s846 + $0x8] sm:$0xf]
      %v850 = vld [vmem:[%s846 + $0xc] sm:$0xf]
      %v851 = vld [vmem:[%s846 + $0x10] sm:$0xf]
      %v852 = vld [vmem:[%s846 + $0x14] sm:$0xf]
      %v853 = vld [vmem:[%s846 + $0x18] sm:$0xf]
      %v854 = vld [vmem:[%s846 + $0x1c] sm:$0xf]
      %v855 = vld [vmem:[%s846 + $0x20] sm:$0xf]
      %v856 = vld [vmem:[%s846 + $0x24] sm:$0xf]
      %v857 = vld [vmem:[%s846 + $0x28] sm:$0xf]
      %v858 = vld [vmem:[%s846 + $0x2c] sm:$0xf]
      %v859 = vld [vmem:[%s846 + $0x30] sm:$0xf]
      %v860 = vld [vmem:[%s846 + $0x34] sm:$0xf]
      %v861 = vld [vmem:[%s846 + $0x38] sm:$0xf]
      %v862 = vld [vmem:[%s846 + $0x3c] sm:$0xf]
      %v879 = vunpack.c.l.b16 %v847
      %v880 = vunpack.c.l.b16 %v848
      %v881 = vunpack.c.l.b16 %v849
      %v882 = vunpack.c.l.b16 %v850
      %v883 = vunpack.c.l.b16 %v851
      %v884 = vunpack.c.l.b16 %v852
      %v885 = vunpack.c.l.b16 %v853
      %v886 = vunpack.c.l.b16 %v854
      %v887 = vunpack.c.l.b16 %v855
      %v888 = vunpack.c.l.b16 %v856
      %v889 = vunpack.c.l.b16 %v857
      %v890 = vunpack.c.l.b16 %v858
      %v891 = vunpack.c.l.b16 %v859
      %v892 = vunpack.c.l.b16 %v860
      %v893 = vunpack.c.l.b16 %v861
      %v894 = vunpack.c.l.b16 %v862
      %v895 = vpack.c.b16 %v880, %v879
      %v896 = vpack.c.b16 %v882, %v881
      %v897 = vpack.c.b16 %v884, %v883
      %v898 = vpack.c.b16 %v886, %v885
      %v899 = vpack.c.b16 %v888, %v887
      %v900 = vpack.c.b16 %v890, %v889
      %v901 = vpack.c.b16 %v892, %v891
      %v902 = vpack.c.b16 %v894, %v893
      %911 = vmatprep.subr.bf16.mxu0 0
      %912 = vmatpush1.bf16.msra.mxu0 %v895
      %913 = vmatprep.subr.bf16.mxu0 0
      %914 = vmatpush1.bf16.msra.mxu0 %v896
      %915 = vmatprep.subr.bf16.mxu0 0
      %916 = vmatpush1.bf16.msra.mxu0 %v897
      %917 = vmatprep.subr.bf16.mxu0 0
      %918 = vmatpush1.bf16.msra.mxu0 %v898
      %919 = vmatprep.subr.bf16.mxu0 0
      %920 = vmatpush1.bf16.msra.mxu0 %v899
      %921 = vmatprep.subr.bf16.mxu0 0
      %922 = vmatpush1.bf16.msra.mxu0 %v900
      %923 = vmatprep.subr.bf16.mxu0 0
      %924 = vmatpush1.bf16.msra.mxu0 %v901
      %925 = vmatprep.subr.bf16.mxu0 0
      %926 = vmatpush1.bf16.msra.mxu0 %v902
      %927 = vmatprep.subr.bf16.mxu0 0
      %928 = vmatpush1.bf16.msra.mxu0 0
      %929 = vmatprep.subr.bf16.mxu0 0
      %930 = vmatpush1.bf16.msra.mxu0 0
      %931 = vmatprep.subr.bf16.mxu0 0
      %932 = vmatpush1.bf16.msra.mxu0 0
      %933 = vmatprep.subr.bf16.mxu0 0
      %934 = vmatpush1.bf16.msra.mxu0 0
      %935 = vmatprep.subr.bf16.mxu0 0
      %936 = vmatpush1.bf16.msra.mxu0 0
      %937 = vmatprep.subr.bf16.mxu0 0
      %938 = vmatpush1.bf16.msra.mxu0 0
      %939 = vmatprep.subr.bf16.mxu0 0
      %940 = vmatpush1.bf16.msra.mxu0 0
      %941 = vmatprep.subr.bf16.mxu0 0
      %942 = vmatpush1.bf16.msra.mxu0 0
      %943 = vmatprep.mubr.bf16.mxu0 0
      %944 = vmatmul.mubr.bf16.gmra.mrb[0].mxu0 %v477
      %v945 = vpop.f32.mrb[0].mxu0
      %v946 = vadd.f32 0.0, %v945
      %v947 = vpop.f32.mrb[0].mxu0
      %v948 = vpop.f32.mrb[0].mxu0
      %v949 = vadd.f32 0.0, %v948
      %v950 = vpop.f32.mrb[0].mxu0
      %951 = vmatprep.mubr.bf16.mxu0 0
      %952 = vmatmul.mubr.bf16.gmra.mrb[0].mxu0 %v478
      %v953 = vpop.f32.mrb[0].mxu0
      %v954 = vadd.f32 0.0, %v953
      %v955 = vpop.f32.mrb[0].mxu0
      %v956 = vpop.f32.mrb[0].mxu0
      %v957 = vpop.f32.mrb[0].mxu0
      %958 = vmatprep.mubr.bf16.mxu0 0
      %959 = vmatmul.mubr.bf16.gmra.mrb[0].mxu0 %v479
      %v960 = vpop.f32.mrb[0].mxu0
      %v961 = vadd.f32 0.0, %v960
      %v962 = vpop.f32.mrb[0].mxu0
      %v963 = vpop.f32.mrb[0].mxu0
      %v964 = vadd.f32 0.0, %v963
      %v965 = vpop.f32.mrb[0].mxu0
      %966 = vmatprep.mubr.bf16.mxu0 0
      %967 = vmatmul.mubr.bf16.gmra.mrb[0].mxu0 %v480
      %v968 = vpop.f32.mrb[0].mxu0
      %v969 = vadd.f32 0.0, %v968
      %v970 = vpop.f32.mrb[0].mxu0
      %v971 = vpop.f32.mrb[0].mxu0
      %v972 = vpop.f32.mrb[0].mxu0
      %973 = vmatprep.mubr.bf16.mxu0 0
      %974 = vmatmul.mubr.bf16.gmra.mrb[0].mxu0 %v481
      %v975 = vpop.f32.mrb[0].mxu0
      %v976 = vadd.f32 0.0, %v975
      %v977 = vpop.f32.mrb[0].mxu0
      %v978 = vpop.f32.mrb[0].mxu0
      %v979 = vadd.f32 0.0, %v978
      %v980 = vpop.f32.mrb[0].mxu0
      %981 = vmatprep.mubr.bf16.mxu0 0
      %982 = vmatmul.mubr.bf16.gmra.mrb[0].mxu0 %v482
      %v983 = vpop.f32.mrb[0].mxu0
      %v984 = vadd.f32 0.0, %v983
      %v985 = vpop.f32.mrb[0].mxu0
      %v986 = vpop.f32.mrb[0].mxu0
      %v987 = vpop.f32.mrb[0].mxu0
      %988 = vmatprep.mubr.bf16.mxu0 0
      %989 = vmatmul.mubr.bf16.gmra.mrb[0].mxu0 %v483
      %v990 = vpop.f32.mrb[0].mxu0
      %v991 = vadd.f32 0.0, %v990
      %v992 = vpop.f32.mrb[0].mxu0
      %v993 = vpop.f32.mrb[0].mxu0
      %v994 = vadd.f32 0.0, %v993
      %v995 = vpop.f32.mrb[0].mxu0
      %996 = vmatprep.mubr.bf16.mxu0 0
      %997 = vmatmul.mubr.bf16.gmra.mrb[0].mxu0 %v484
      %v998 = vpop.f32.mrb[0].mxu0
      %v999 = vadd.f32 0.0, %v998
      %v1000 = vpop.f32.mrb[0].mxu0
      %v1001 = vpop.f32.mrb[0].mxu0
      %v1002 = vpop.f32.mrb[0].mxu0
      %1003 = vmatprep.mubr.bf16.mxu0 0
      %1004 = vmatmul.mubr.bf16.gmra.mrb[0].mxu0 %v485
      %v1005 = vpop.f32.mrb[0].mxu0
      %v1006 = vadd.f32 0.0, %v1005
      %v1007 = vpop.f32.mrb[0].mxu0
      %v1008 = vpop.f32.mrb[0].mxu0
      %v1009 = vadd.f32 0.0, %v1008
      %v1010 = vpop.f32.mrb[0].mxu0
      %1011 = vmatprep.mubr.bf16.mxu0 0
      %1012 = vmatmul.mubr.bf16.gmra.mrb[0].mxu0 %v486
      %v1013 = vpop.f32.mrb[0].mxu0
      %v1014 = vadd.f32 0.0, %v1013
      %v1015 = vpop.f32.mrb[0].mxu0
      %v1016 = vpop.f32.mrb[0].mxu0
      %v1017 = vpop.f32.mrb[0].mxu0
      %1018 = vmatprep.mubr.bf16.mxu0 0
      %1019 = vmatmul.mubr.bf16.gmra.mrb[0].mxu0 %v487
      %v1020 = vpop.f32.mrb[0].mxu0
      %v1021 = vadd.f32 0.0, %v1020
      %v1022 = vpop.f32.mrb[0].mxu0
      %v1023 = vpop.f32.mrb[0].mxu0
      %v1024 = vadd.f32 0.0, %v1023
      %v1025 = vpop.f32.mrb[0].mxu0
      %1026 = vmatprep.mubr.bf16.mxu0 0
      %1027 = vmatmul.mubr.bf16.gmra.mrb[0].mxu0 %v488
      %v1028 = vpop.f32.mrb[0].mxu0
      %v1029 = vadd.f32 0.0, %v1028
      %v1030 = vpop.f32.mrb[0].mxu0
      %v1031 = vpop.f32.mrb[0].mxu0
      %v1032 = vpop.f32.mrb[0].mxu0
      %1033 = vmatprep.mubr.bf16.mxu0 0
      %1034 = vmatmul.mubr.bf16.gmra.mrb[0].mxu0 %v489
      %v1035 = vpop.f32.mrb[0].mxu0
      %v1036 = vadd.f32 0.0, %v1035
      %v1037 = vpop.f32.mrb[0].mxu0
      %v1038 = vpop.f32.mrb[0].mxu0
      %v1039 = vadd.f32 0.0, %v1038
      %v1040 = vpop.f32.mrb[0].mxu0
      %1041 = vmatprep.mubr.bf16.mxu0 0
      %1042 = vmatmul.mubr.bf16.gmra.mrb[0].mxu0 %v490
      %v1043 = vpop.f32.mrb[0].mxu0
      %v1044 = vadd.f32 0.0, %v1043
      %v1045 = vpop.f32.mrb[0].mxu0
      %v1046 = vpop.f32.mrb[0].mxu0
      %v1047 = vpop.f32.mrb[0].mxu0
      %1048 = vmatprep.mubr.bf16.mxu0 0
      %1049 = vmatmul.mubr.bf16.gmra.mrb[0].mxu0 %v491
      %v1050 = vpop.f32.mrb[0].mxu0
      %v1051 = vadd.f32 0.0, %v1050
      %v1052 = vpop.f32.mrb[0].mxu0
      %v1053 = vpop.f32.mrb[0].mxu0
      %v1054 = vadd.f32 0.0, %v1053
      %v1055 = vpop.f32.mrb[0].mxu0
      %1056 = vmatprep.mubr.bf16.mxu0 0
      %1057 = vmatmul.mubr.bf16.gmra.mrb[0].mxu0 %v492
      %v1058 = vpop.f32.mrb[0].mxu0
      %v1059 = vadd.f32 0.0, %v1058
      %v1060 = vpop.f32.mrb[0].mxu0
      %v1061 = vpop.f32.mrb[0].mxu0
      %v1062 = vpop.f32.mrb[0].mxu0
      %1063 = vmatprep.mubr.bf16.mxu0 0
      %1064 = vmatmul.mubr.bf16.gmra.mrb[0].mxu0 %v493
      %v1065 = vpop.f32.mrb[0].mxu0
      %v1066 = vadd.f32 0.0, %v1065
      %v1067 = vpop.f32.mrb[0].mxu0
      %v1068 = vpop.f32.mrb[0].mxu0
      %v1069 = vadd.f32 0.0, %v1068
      %v1070 = vpop.f32.mrb[0].mxu0
      %1071 = vmatprep.mubr.bf16.mxu0 0
      %1072 = vmatmul.mubr.bf16.gmra.mrb[0].mxu0 %v494
      %v1073 = vpop.f32.mrb[0].mxu0
      %v1074 = vadd.f32 0.0, %v1073
      %v1075 = vpop.f32.mrb[0].mxu0
      %v1076 = vpop.f32.mrb[0].mxu0
      %v1077 = vpop.f32.mrb[0].mxu0
      %1078 = vmatprep.mubr.bf16.mxu0 0
      %1079 = vmatmul.mubr.bf16.gmra.mrb[0].mxu0 %v495
      %v1080 = vpop.f32.mrb[0].mxu0
      %v1081 = vadd.f32 0.0, %v1080
      %v1082 = vpop.f32.mrb[0].mxu0
      %v1083 = vpop.f32.mrb[0].mxu0
      %v1084 = vadd.f32 0.0, %v1083
      %v1085 = vpop.f32.mrb[0].mxu0
      %1086 = vmatprep.mubr.bf16.mxu0 0
      %1087 = vmatmul.mubr.bf16.gmra.mrb[0].mxu0 %v496
      %v1088 = vpop.f32.mrb[0].mxu0
      %v1089 = vadd.f32 0.0, %v1088
      %v1090 = vpop.f32.mrb[0].mxu0
      %v1091 = vpop.f32.mrb[0].mxu0
      %v1092 = vpop.f32.mrb[0].mxu0
      %1093 = vmatprep.mubr.bf16.mxu0 0
      %1094 = vmatmul.mubr.bf16.gmra.mrb[0].mxu0 %v497
      %v1095 = vpop.f32.mrb[0].mxu0
      %v1096 = vadd.f32 0.0, %v1095
      %v1097 = vpop.f32.mrb[0].mxu0
      %v1098 = vpop.f32.mrb[0].mxu0
      %v1099 = vadd.f32 0.0, %v1098
      %v1100 = vpop.f32.mrb[0].mxu0
      %1101 = vmatprep.mubr.bf16.mxu0 0
      %1102 = vmatmul.mubr.bf16.gmra.mrb[0].mxu0 %v498
      %v1103 = vpop.f32.mrb[0].mxu0
      %v1104 = vadd.f32 0.0, %v1103
      %v1105 = vpop.f32.mrb[0].mxu0
      %v1106 = vpop.f32.mrb[0].mxu0
      %v1107 = vpop.f32.mrb[0].mxu0
      %1108 = vmatprep.mubr.bf16.mxu0 0
      %1109 = vmatmul.mubr.bf16.gmra.mrb[0].mxu0 %v499
      %v1110 = vpop.f32.mrb[0].mxu0
      %v1111 = vadd.f32 0.0, %v1110
      %v1112 = vpop.f32.mrb[0].mxu0
      %v1113 = vpop.f32.mrb[0].mxu0
      %v1114 = vadd.f32 0.0, %v1113
      %v1115 = vpop.f32.mrb[0].mxu0
      %1116 = vmatprep.mubr.bf16.mxu0 0
      %1117 = vmatmul.mubr.bf16.gmra.mrb[0].mxu0 %v500
      %v1118 = vpop.f32.mrb[0].mxu0
      %v1119 = vadd.f32 0.0, %v1118
      %v1120 = vpop.f32.mrb[0].mxu0
      %v1121 = vpop.f32.mrb[0].mxu0
      %v1122 = vpop.f32.mrb[0].mxu0
      %1123 = vmatprep.mubr.bf16.mxu0 0
      %1124 = vmatmul.mubr.bf16.gmra.mrb[0].mxu0 %v501
      %v1125 = vpop.f32.mrb[0].mxu0
      %v1126 = vadd.f32 0.0, %v1125
      %v1127 = vpop.f32.mrb[0].mxu0
      %v1128 = vpop.f32.mrb[0].mxu0
      %v1129 = vadd.f32 0.0, %v1128
      %v1130 = vpop.f32.mrb[0].mxu0
      %1131 = vmatprep.mubr.bf16.mxu0 0
      %1132 = vmatmul.mubr.bf16.gmra.mrb[0].mxu0 %v502
      %v1133 = vpop.f32.mrb[0].mxu0
      %v1134 = vadd.f32 0.0, %v1133
      %v1135 = vpop.f32.mrb[0].mxu0
      %v1136 = vpop.f32.mrb[0].mxu0
      %v1137 = vpop.f32.mrb[0].mxu0
      %1138 = vmatprep.mubr.bf16.mxu0 0
      %1139 = vmatmul.mubr.bf16.gmra.mrb[0].mxu0 %v503
      %v1140 = vpop.f32.mrb[0].mxu0
      %v1141 = vadd.f32 0.0, %v1140
      %v1142 = vpop.f32.mrb[0].mxu0
      %v1143 = vpop.f32.mrb[0].mxu0
      %v1144 = vadd.f32 0.0, %v1143
      %v1145 = vpop.f32.mrb[0].mxu0
      %1146 = vmatprep.mubr.bf16.mxu0 0
      %1147 = vmatmul.mubr.bf16.gmra.mrb[0].mxu0 %v504
      %v1148 = vpop.f32.mrb[0].mxu0
      %v1149 = vadd.f32 0.0, %v1148
      %v1150 = vpop.f32.mrb[0].mxu0
      %v1151 = vpop.f32.mrb[0].mxu0
      %v1152 = vpop.f32.mrb[0].mxu0
      %1153 = vmatprep.mubr.bf16.mxu0 0
      %1154 = vmatmul.mubr.bf16.gmra.mrb[0].mxu0 %v505
      %v1155 = vpop.f32.mrb[0].mxu0
      %v1156 = vadd.f32 0.0, %v1155
      %v1157 = vpop.f32.mrb[0].mxu0
      %v1158 = vpop.f32.mrb[0].mxu0
      %v1159 = vadd.f32 0.0, %v1158
      %v1160 = vpop.f32.mrb[0].mxu0
      %1161 = vmatprep.mubr.bf16.mxu0 0
      %1162 = vmatmul.mubr.bf16.gmra.mrb[0].mxu0 %v506
      %v1163 = vpop.f32.mrb[0].mxu0
      %v1164 = vadd.f32 0.0, %v1163
      %v1165 = vpop.f32.mrb[0].mxu0
      %v1166 = vpop.f32.mrb[0].mxu0
      %v1167 = vpop.f32.mrb[0].mxu0
      %1168 = vmatprep.mubr.bf16.mxu0 0
      %1169 = vmatmul.mubr.bf16.gmra.mrb[0].mxu0 %v507
      %v1170 = vpop.f32.mrb[0].mxu0
      %v1171 = vadd.f32 0.0, %v1170
      %v1172 = vpop.f32.mrb[0].mxu0
      %v1173 = vpop.f32.mrb[0].mxu0
      %v1174 = vadd.f32 0.0, %v1173
      %v1175 = vpop.f32.mrb[0].mxu0
      %1176 = vmatprep.mubr.bf16.mxu0 0
      %1177 = vmatmul.mubr.bf16.gmra.mrb[0].mxu0 %v508
      %v1178 = vpop.f32.mrb[0].mxu0
      %v1179 = vadd.f32 0.0, %v1178
      %v1180 = vpop.f32.mrb[0].mxu0
      %v1181 = vpop.f32.mrb[0].mxu0
      %v1182 = vpop.f32.mrb[0].mxu0
      %1183 = vdwg.mxu0
      %v1184 = vrot.slane %v946, 1
      %v1185 = vrot.slane %v949, 1
      %v1186 = vrot.slane %v954, 1
      %v1187 = vrot.slane %v961, 1
      %v1188 = vrot.slane %v964, 1
      %v1189 = vrot.slane %v969, 1
      %v1190 = vrot.slane %v976, 1
      %v1191 = vrot.slane %v979, 1
      %v1192 = vrot.slane %v984, 1
      %v1193 = vrot.slane %v991, 1
      %v1194 = vrot.slane %v994, 1
      %v1195 = vrot.slane %v999, 1
      %v1196 = vrot.slane %v1006, 1
      %v1197 = vrot.slane %v1009, 1
      %v1198 = vrot.slane %v1014, 1
      %v1199 = vrot.slane %v1021, 1
      %v1200 = vrot.slane %v1024, 1
      %v1201 = vrot.slane %v1029, 1
      %v1202 = vrot.slane %v1036, 1
      %v1203 = vrot.slane %v1039, 1
      %v1204 = vrot.slane %v1044, 1
      %v1205 = vrot.slane %v1051, 1
      %v1206 = vrot.slane %v1054, 1
      %v1207 = vrot.slane %v1059, 1
      %v1208 = vrot.slane %v1066, 1
      %v1209 = vrot.slane %v1069, 1
      %v1210 = vrot.slane %v1074, 1
      %v1211 = vrot.slane %v1081, 1
      %v1212 = vrot.slane %v1084, 1
      %v1213 = vrot.slane %v1089, 1
      %v1214 = vrot.slane %v1096, 1
      %v1215 = vrot.slane %v1099, 1
      %v1216 = vrot.slane %v1104, 1
      %v1217 = vrot.slane %v1111, 1
      %v1218 = vrot.slane %v1114, 1
      %v1219 = vrot.slane %v1119, 1
      %v1220 = vrot.slane %v1126, 1
      %v1221 = vrot.slane %v1129, 1
      %v1222 = vrot.slane %v1134, 1
      %v1223 = vrot.slane %v1141, 1
      %v1224 = vrot.slane %v1144, 1
      %v1225 = vrot.slane %v1149, 1
      %v1226 = vrot.slane %v1156, 1
      %v1227 = vrot.slane %v1159, 1
      %v1228 = vrot.slane %v1164, 1
      %v1229 = vrot.slane %v1171, 1
      %v1230 = vrot.slane %v1174, 1
      %v1231 = vrot.slane %v1179, 1
      %v1232 = vlaneseq
      %v1233 = vshrl.u32 %v1232, 7
      %vm1234 = vcmp.lt.s32.totalorder %v1233, 7
      %v1235 = vsel %vm1234, %v1230, %v1231
      %v1236 = vsel %vm1234, %v1229, %v1230
      %v1237 = vsel %vm1234, %v1227, %v1228
      %v1238 = vsel %vm1234, %v1226, %v1227
      %v1239 = vsel %vm1234, %v1224, %v1225
      %v1240 = vsel %vm1234, %v1223, %v1224
      %v1241 = vsel %vm1234, %v1221, %v1222
      %v1242 = vsel %vm1234, %v1220, %v1221
      %v1243 = vsel %vm1234, %v1218, %v1219
      %v1244 = vsel %vm1234, %v1217, %v1218
      %v1245 = vsel %vm1234, %v1215, %v1216
      %v1246 = vsel %vm1234, %v1214, %v1215
      %v1247 = vsel %vm1234, %v1212, %v1213
      %v1248 = vsel %vm1234, %v1211, %v1212
      %v1249 = vsel %vm1234, %v1209, %v1210
      %v1250 = vsel %vm1234, %v1208, %v1209
      %v1251 = vsel %vm1234, %v1206, %v1207
      %v1252 = vsel %vm1234, %v1205, %v1206
      %v1253 = vsel %vm1234, %v1203, %v1204
      %v1254 = vsel %vm1234, %v1202, %v1203
      %v1255 = vsel %vm1234, %v1200, %v1201
      %v1256 = vsel %vm1234, %v1199, %v1200
      %v1257 = vsel %vm1234, %v1197, %v1198
      %v1258 = vsel %vm1234, %v1196, %v1197
      %v1259 = vsel %vm1234, %v1194, %v1195
      %v1260 = vsel %vm1234, %v1193, %v1194
      %v1261 = vsel %vm1234, %v1191, %v1192
      %v1262 = vsel %vm1234, %v1190, %v1191
      %v1263 = vsel %vm1234, %v1188, %v1189
      %v1264 = vsel %vm1234, %v1187, %v1188
      %v1265 = vsel %vm1234, %v1185, %v1186
      %v1266 = vsel %vm1234, %v1184, %v1185
      %v1267 = vadd.f32 %v624, %v1266
      %v1268 = vadd.f32 %v627, %v1265
      %v1269 = vadd.f32 %v638, %v1264
      %v1270 = vadd.f32 %v641, %v1263
      %v1271 = vadd.f32 %v652, %v1262
      %v1272 = vadd.f32 %v655, %v1261
      %v1273 = vadd.f32 %v666, %v1260
      %v1274 = vadd.f32 %v669, %v1259
      %v1275 = vadd.f32 %v680, %v1258
      %v1276 = vadd.f32 %v683, %v1257
      %v1277 = vadd.f32 %v694, %v1256
      %v1278 = vadd.f32 %v697, %v1255
      %v1279 = vadd.f32 %v708, %v1254
      %v1280 = vadd.f32 %v711, %v1253
      %v1281 = vadd.f32 %v722, %v1252
      %v1282 = vadd.f32 %v725, %v1251
      %v1283 = vadd.f32 %v736, %v1250
      %v1284 = vadd.f32 %v739, %v1249
      %v1285 = vadd.f32 %v750, %v1248
      %v1286 = vadd.f32 %v753, %v1247
      %v1287 = vadd.f32 %v764, %v1246
      %v1288 = vadd.f32 %v767, %v1245
      %v1289 = vadd.f32 %v778, %v1244
      %v1290 = vadd.f32 %v781, %v1243
      %v1291 = vadd.f32 %v792, %v1242
      %v1292 = vadd.f32 %v795, %v1241
      %v1293 = vadd.f32 %v806, %v1240
      %v1294 = vadd.f32 %v809, %v1239
      %v1295 = vadd.f32 %v820, %v1238
      %v1296 = vadd.f32 %v823, %v1237
      %v1297 = vadd.f32 %v834, %v1236
      %v1298 = vadd.f32 %v837, %v1235
      %s1299 = scalar_lea.vmem %s243, 128
      %v1300 = vld [vmem:[%s1299] sm:$0xf]
      %v1301 = vld [vmem:[%s1299 + $0x4] sm:$0xf]
      %v1302 = vld [vmem:[%s1299 + $0x8] sm:$0xf]
      %v1303 = vld [vmem:[%s1299 + $0xc] sm:$0xf]
      %v1304 = vld [vmem:[%s1299 + $0x10] sm:$0xf]
      %v1305 = vld [vmem:[%s1299 + $0x14] sm:$0xf]
      %v1306 = vld [vmem:[%s1299 + $0x18] sm:$0xf]
      %v1307 = vld [vmem:[%s1299 + $0x1c] sm:$0xf]
      %v1308 = vld [vmem:[%s1299 + $0x20] sm:$0xf]
      %v1309 = vld [vmem:[%s1299 + $0x24] sm:$0xf]
      %v1310 = vld [vmem:[%s1299 + $0x28] sm:$0xf]
      %v1311 = vld [vmem:[%s1299 + $0x2c] sm:$0xf]
      %v1312 = vld [vmem:[%s1299 + $0x30] sm:$0xf]
      %v1313 = vld [vmem:[%s1299 + $0x34] sm:$0xf]
      %v1314 = vld [vmem:[%s1299 + $0x38] sm:$0xf]
      %v1315 = vld [vmem:[%s1299 + $0x3c] sm:$0xf]
      %v1332 = vunpack.c.l.b16 %v1300
      %v1333 = vunpack.c.l.b16 %v1301
      %v1334 = vunpack.c.l.b16 %v1302
      %v1335 = vunpack.c.l.b16 %v1303
      %v1336 = vunpack.c.l.b16 %v1304
      %v1337 = vunpack.c.l.b16 %v1305
      %v1338 = vunpack.c.l.b16 %v1306
      %v1339 = vunpack.c.l.b16 %v1307
      %v1340 = vunpack.c.l.b16 %v1308
      %v1341 = vunpack.c.l.b16 %v1309
      %v1342 = vunpack.c.l.b16 %v1310
      %v1343 = vunpack.c.l.b16 %v1311
      %v1344 = vunpack.c.l.b16 %v1312
      %v1345 = vunpack.c.l.b16 %v1313
      %v1346 = vunpack.c.l.b16 %v1314
      %v1347 = vunpack.c.l.b16 %v1315
      %v1348 = vpack.c.b16 %v1333, %v1332
      %v1349 = vpack.c.b16 %v1335, %v1334
      %v1350 = vpack.c.b16 %v1337, %v1336
      %v1351 = vpack.c.b16 %v1339, %v1338
      %v1352 = vpack.c.b16 %v1341, %v1340
      %v1353 = vpack.c.b16 %v1343, %v1342
      %v1354 = vpack.c.b16 %v1345, %v1344
      %v1355 = vpack.c.b16 %v1347, %v1346
      %1364 = vmatprep.subr.bf16.mxu0 0
      %1365 = vmatpush1.bf16.msra.mxu0 %v1348
      %1366 = vmatprep.subr.bf16.mxu0 0
      %1367 = vmatpush1.bf16.msra.mxu0 %v1349
      %1368 = vmatprep.subr.bf16.mxu0 0
      %1369 = vmatpush1.bf16.msra.mxu0 %v1350
      %1370 = vmatprep.subr.bf16.mxu0 0
      %1371 = vmatpush1.bf16.msra.mxu0 %v1351
      %1372 = vmatprep.subr.bf16.mxu0 0
      %1373 = vmatpush1.bf16.msra.mxu0 %v1352
      %1374 = vmatprep.subr.bf16.mxu0 0
      %1375 = vmatpush1.bf16.msra.mxu0 %v1353
      %1376 = vmatprep.subr.bf16.mxu0 0
      %1377 = vmatpush1.bf16.msra.mxu0 %v1354
      %1378 = vmatprep.subr.bf16.mxu0 0
      %1379 = vmatpush1.bf16.msra.mxu0 %v1355
      %1380 = vmatprep.subr.bf16.mxu0 0
      %1381 = vmatpush1.bf16.msra.mxu0 0
      %1382 = vmatprep.subr.bf16.mxu0 0
      %1383 = vmatpush1.bf16.msra.mxu0 0
      %1384 = vmatprep.subr.bf16.mxu0 0
      %1385 = vmatpush1.bf16.msra.mxu0 0
      %1386 = vmatprep.subr.bf16.mxu0 0
      %1387 = vmatpush1.bf16.msra.mxu0 0
      %1388 = vmatprep.subr.bf16.mxu0 0
      %1389 = vmatpush1.bf16.msra.mxu0 0
      %1390 = vmatprep.subr.bf16.mxu0 0
      %1391 = vmatpush1.bf16.msra.mxu0 0
      %1392 = vmatprep.subr.bf16.mxu0 0
      %1393 = vmatpush1.bf16.msra.mxu0 0
      %1394 = vmatprep.subr.bf16.mxu0 0
      %1395 = vmatpush1.bf16.msra.mxu0 0
      %1396 = vmatprep.mubr.bf16.mxu0 0
      %1397 = vmatmul.mubr.bf16.gmra.mrb[0].mxu0 %v477
      %v1398 = vpop.f32.mrb[0].mxu0
      %v1399 = vadd.f32 0.0, %v1398
      %v1400 = vpop.f32.mrb[0].mxu0
      %v1401 = vpop.f32.mrb[0].mxu0
      %v1402 = vadd.f32 0.0, %v1401
      %v1403 = vpop.f32.mrb[0].mxu0
      %1404 = vmatprep.mubr.bf16.mxu0 0
      %1405 = vmatmul.mubr.bf16.gmra.mrb[0].mxu0 %v478
      %v1406 = vpop.f32.mrb[0].mxu0
      %v1407 = vadd.f32 0.0, %v1406
      %v1408 = vpop.f32.mrb[0].mxu0
      %v1409 = vpop.f32.mrb[0].mxu0
      %v1410 = vpop.f32.mrb[0].mxu0
      %1411 = vmatprep.mubr.bf16.mxu0 0
      %1412 = vmatmul.mubr.bf16.gmra.mrb[0].mxu0 %v479
      %v1413 = vpop.f32.mrb[0].mxu0
      %v1414 = vadd.f32 0.0, %v1413
      %v1415 = vpop.f32.mrb[0].mxu0
      %v1416 = vpop.f32.mrb[0].mxu0
      %v1417 = vadd.f32 0.0, %v1416
      %v1418 = vpop.f32.mrb[0].mxu0
      %1419 = vmatprep.mubr.bf16.mxu0 0
      %1420 = vmatmul.mubr.bf16.gmra.mrb[0].mxu0 %v480
      %v1421 = vpop.f32.mrb[0].mxu0
      %v1422 = vadd.f32 0.0, %v1421
      %v1423 = vpop.f32.mrb[0].mxu0
      %v1424 = vpop.f32.mrb[0].mxu0
      %v1425 = vpop.f32.mrb[0].mxu0
      %1426 = vmatprep.mubr.bf16.mxu0 0
      %1427 = vmatmul.mubr.bf16.gmra.mrb[0].mxu0 %v481
      %v1428 = vpop.f32.mrb[0].mxu0
      %v1429 = vadd.f32 0.0, %v1428
      %v1430 = vpop.f32.mrb[0].mxu0
      %v1431 = vpop.f32.mrb[0].mxu0
      %v1432 = vadd.f32 0.0, %v1431
      %v1433 = vpop.f32.mrb[0].mxu0
      %1434 = vmatprep.mubr.bf16.mxu0 0
      %1435 = vmatmul.mubr.bf16.gmra.mrb[0].mxu0 %v482
      %v1436 = vpop.f32.mrb[0].mxu0
      %v1437 = vadd.f32 0.0, %v1436
      %v1438 = vpop.f32.mrb[0].mxu0
      %v1439 = vpop.f32.mrb[0].mxu0
      %v1440 = vpop.f32.mrb[0].mxu0
      %1441 = vmatprep.mubr.bf16.mxu0 0
      %1442 = vmatmul.mubr.bf16.gmra.mrb[0].mxu0 %v483
      %v1443 = vpop.f32.mrb[0].mxu0
      %v1444 = vadd.f32 0.0, %v1443
      %v1445 = vpop.f32.mrb[0].mxu0
      %v1446 = vpop.f32.mrb[0].mxu0
      %v1447 = vadd.f32 0.0, %v1446
      %v1448 = vpop.f32.mrb[0].mxu0
      %1449 = vmatprep.mubr.bf16.mxu0 0
      %1450 = vmatmul.mubr.bf16.gmra.mrb[0].mxu0 %v484
      %v1451 = vpop.f32.mrb[0].mxu0
      %v1452 = vadd.f32 0.0, %v1451
      %v1453 = vpop.f32.mrb[0].mxu0
      %v1454 = vpop.f32.mrb[0].mxu0
      %v1455 = vpop.f32.mrb[0].mxu0
      %1456 = vmatprep.mubr.bf16.mxu0 0
      %1457 = vmatmul.mubr.bf16.gmra.mrb[0].mxu0 %v485
      %v1458 = vpop.f32.mrb[0].mxu0
      %v1459 = vadd.f32 0.0, %v1458
      %v1460 = vpop.f32.mrb[0].mxu0
      %v1461 = vpop.f32.mrb[0].mxu0
      %v1462 = vadd.f32 0.0, %v1461
      %v1463 = vpop.f32.mrb[0].mxu0
      %1464 = vmatprep.mubr.bf16.mxu0 0
      %1465 = vmatmul.mubr.bf16.gmra.mrb[0].mxu0 %v486
      %v1466 = vpop.f32.mrb[0].mxu0
      %v1467 = vadd.f32 0.0, %v1466
      %v1468 = vpop.f32.mrb[0].mxu0
      %v1469 = vpop.f32.mrb[0].mxu0
      %v1470 = vpop.f32.mrb[0].mxu0
      %1471 = vmatprep.mubr.bf16.mxu0 0
      %1472 = vmatmul.mubr.bf16.gmra.mrb[0].mxu0 %v487
      %v1473 = vpop.f32.mrb[0].mxu0
      %v1474 = vadd.f32 0.0, %v1473
      %v1475 = vpop.f32.mrb[0].mxu0
      %v1476 = vpop.f32.mrb[0].mxu0
      %v1477 = vadd.f32 0.0, %v1476
      %v1478 = vpop.f32.mrb[0].mxu0
      %1479 = vmatprep.mubr.bf16.mxu0 0
      %1480 = vmatmul.mubr.bf16.gmra.mrb[0].mxu0 %v488
      %v1481 = vpop.f32.mrb[0].mxu0
      %v1482 = vadd.f32 0.0, %v1481
      %v1483 = vpop.f32.mrb[0].mxu0
      %v1484 = vpop.f32.mrb[0].mxu0
      %v1485 = vpop.f32.mrb[0].mxu0
      %1486 = vmatprep.mubr.bf16.mxu0 0
      %1487 = vmatmul.mubr.bf16.gmra.mrb[0].mxu0 %v489
      %v1488 = vpop.f32.mrb[0].mxu0
      %v1489 = vadd.f32 0.0, %v1488
      %v1490 = vpop.f32.mrb[0].mxu0
      %v1491 = vpop.f32.mrb[0].mxu0
      %v1492 = vadd.f32 0.0, %v1491
      %v1493 = vpop.f32.mrb[0].mxu0
      %1494 = vmatprep.mubr.bf16.mxu0 0
      %1495 = vmatmul.mubr.bf16.gmra.mrb[0].mxu0 %v490
      %v1496 = vpop.f32.mrb[0].mxu0
      %v1497 = vadd.f32 0.0, %v1496
      %v1498 = vpop.f32.mrb[0].mxu0
      %v1499 = vpop.f32.mrb[0].mxu0
      %v1500 = vpop.f32.mrb[0].mxu0
      %1501 = vmatprep.mubr.bf16.mxu0 0
      %1502 = vmatmul.mubr.bf16.gmra.mrb[0].mxu0 %v491
      %v1503 = vpop.f32.mrb[0].mxu0
      %v1504 = vadd.f32 0.0, %v1503
      %v1505 = vpop.f32.mrb[0].mxu0
      %v1506 = vpop.f32.mrb[0].mxu0
      %v1507 = vadd.f32 0.0, %v1506
      %v1508 = vpop.f32.mrb[0].mxu0
      %1509 = vmatprep.mubr.bf16.mxu0 0
      %1510 = vmatmul.mubr.bf16.gmra.mrb[0].mxu0 %v492
      %v1511 = vpop.f32.mrb[0].mxu0
      %v1512 = vadd.f32 0.0, %v1511
      %v1513 = vpop.f32.mrb[0].mxu0
      %v1514 = vpop.f32.mrb[0].mxu0
      %v1515 = vpop.f32.mrb[0].mxu0
      %1516 = vmatprep.mubr.bf16.mxu0 0
      %1517 = vmatmul.mubr.bf16.gmra.mrb[0].mxu0 %v493
      %v1518 = vpop.f32.mrb[0].mxu0
      %v1519 = vadd.f32 0.0, %v1518
      %v1520 = vpop.f32.mrb[0].mxu0
      %v1521 = vpop.f32.mrb[0].mxu0
      %v1522 = vadd.f32 0.0, %v1521
      %v1523 = vpop.f32.mrb[0].mxu0
      %1524 = vmatprep.mubr.bf16.mxu0 0
      %1525 = vmatmul.mubr.bf16.gmra.mrb[0].mxu0 %v494
      %v1526 = vpop.f32.mrb[0].mxu0
      %v1527 = vadd.f32 0.0, %v1526
      %v1528 = vpop.f32.mrb[0].mxu0
      %v1529 = vpop.f32.mrb[0].mxu0
      %v1530 = vpop.f32.mrb[0].mxu0
      %1531 = vmatprep.mubr.bf16.mxu0 0
      %1532 = vmatmul.mubr.bf16.gmra.mrb[0].mxu0 %v495
      %v1533 = vpop.f32.mrb[0].mxu0
      %v1534 = vadd.f32 0.0, %v1533
      %v1535 = vpop.f32.mrb[0].mxu0
      %v1536 = vpop.f32.mrb[0].mxu0
      %v1537 = vadd.f32 0.0, %v1536
      %v1538 = vpop.f32.mrb[0].mxu0
      %1539 = vmatprep.mubr.bf16.mxu0 0
      %1540 = vmatmul.mubr.bf16.gmra.mrb[0].mxu0 %v496
      %v1541 = vpop.f32.mrb[0].mxu0
      %v1542 = vadd.f32 0.0, %v1541
      %v1543 = vpop.f32.mrb[0].mxu0
      %v1544 = vpop.f32.mrb[0].mxu0
      %v1545 = vpop.f32.mrb[0].mxu0
      %1546 = vmatprep.mubr.bf16.mxu0 0
      %1547 = vmatmul.mubr.bf16.gmra.mrb[0].mxu0 %v497
      %v1548 = vpop.f32.mrb[0].mxu0
      %v1549 = vadd.f32 0.0, %v1548
      %v1550 = vpop.f32.mrb[0].mxu0
      %v1551 = vpop.f32.mrb[0].mxu0
      %v1552 = vadd.f32 0.0, %v1551
      %v1553 = vpop.f32.mrb[0].mxu0
      %1554 = vmatprep.mubr.bf16.mxu0 0
      %1555 = vmatmul.mubr.bf16.gmra.mrb[0].mxu0 %v498
      %v1556 = vpop.f32.mrb[0].mxu0
      %v1557 = vadd.f32 0.0, %v1556
      %v1558 = vpop.f32.mrb[0].mxu0
      %v1559 = vpop.f32.mrb[0].mxu0
      %v1560 = vpop.f32.mrb[0].mxu0
      %1561 = vmatprep.mubr.bf16.mxu0 0
      %1562 = vmatmul.mubr.bf16.gmra.mrb[0].mxu0 %v499
      %v1563 = vpop.f32.mrb[0].mxu0
      %v1564 = vadd.f32 0.0, %v1563
      %v1565 = vpop.f32.mrb[0].mxu0
      %v1566 = vpop.f32.mrb[0].mxu0
      %v1567 = vadd.f32 0.0, %v1566
      %v1568 = vpop.f32.mrb[0].mxu0
      %1569 = vmatprep.mubr.bf16.mxu0 0
      %1570 = vmatmul.mubr.bf16.gmra.mrb[0].mxu0 %v500
      %v1571 = vpop.f32.mrb[0].mxu0
      %v1572 = vadd.f32 0.0, %v1571
      %v1573 = vpop.f32.mrb[0].mxu0
      %v1574 = vpop.f32.mrb[0].mxu0
      %v1575 = vpop.f32.mrb[0].mxu0
      %1576 = vmatprep.mubr.bf16.mxu0 0
      %1577 = vmatmul.mubr.bf16.gmra.mrb[0].mxu0 %v501
      %v1578 = vpop.f32.mrb[0].mxu0
      %v1579 = vadd.f32 0.0, %v1578
      %v1580 = vpop.f32.mrb[0].mxu0
      %v1581 = vpop.f32.mrb[0].mxu0
      %v1582 = vadd.f32 0.0, %v1581
      %v1583 = vpop.f32.mrb[0].mxu0
      %1584 = vmatprep.mubr.bf16.mxu0 0
      %1585 = vmatmul.mubr.bf16.gmra.mrb[0].mxu0 %v502
      %v1586 = vpop.f32.mrb[0].mxu0
      %v1587 = vadd.f32 0.0, %v1586
      %v1588 = vpop.f32.mrb[0].mxu0
      %v1589 = vpop.f32.mrb[0].mxu0
      %v1590 = vpop.f32.mrb[0].mxu0
      %1591 = vmatprep.mubr.bf16.mxu0 0
      %1592 = vmatmul.mubr.bf16.gmra.mrb[0].mxu0 %v503
      %v1593 = vpop.f32.mrb[0].mxu0
      %v1594 = vadd.f32 0.0, %v1593
      %v1595 = vpop.f32.mrb[0].mxu0
      %v1596 = vpop.f32.mrb[0].mxu0
      %v1597 = vadd.f32 0.0, %v1596
      %v1598 = vpop.f32.mrb[0].mxu0
      %1599 = vmatprep.mubr.bf16.mxu0 0
      %1600 = vmatmul.mubr.bf16.gmra.mrb[0].mxu0 %v504
      %v1601 = vpop.f32.mrb[0].mxu0
      %v1602 = vadd.f32 0.0, %v1601
      %v1603 = vpop.f32.mrb[0].mxu0
      %v1604 = vpop.f32.mrb[0].mxu0
      %v1605 = vpop.f32.mrb[0].mxu0
      %1606 = vmatprep.mubr.bf16.mxu0 0
      %1607 = vmatmul.mubr.bf16.gmra.mrb[0].mxu0 %v505
      %v1608 = vpop.f32.mrb[0].mxu0
      %v1609 = vadd.f32 0.0, %v1608
      %v1610 = vpop.f32.mrb[0].mxu0
      %v1611 = vpop.f32.mrb[0].mxu0
      %v1612 = vadd.f32 0.0, %v1611
      %v1613 = vpop.f32.mrb[0].mxu0
      %1614 = vmatprep.mubr.bf16.mxu0 0
      %1615 = vmatmul.mubr.bf16.gmra.mrb[0].mxu0 %v506
      %v1616 = vpop.f32.mrb[0].mxu0
      %v1617 = vadd.f32 0.0, %v1616
      %v1618 = vpop.f32.mrb[0].mxu0
      %v1619 = vpop.f32.mrb[0].mxu0
      %v1620 = vpop.f32.mrb[0].mxu0
      %1621 = vmatprep.mubr.bf16.mxu0 0
      %1622 = vmatmul.mubr.bf16.gmra.mrb[0].mxu0 %v507
      %v1623 = vpop.f32.mrb[0].mxu0
      %v1624 = vadd.f32 0.0, %v1623
      %v1625 = vpop.f32.mrb[0].mxu0
      %v1626 = vpop.f32.mrb[0].mxu0
      %v1627 = vadd.f32 0.0, %v1626
      %v1628 = vpop.f32.mrb[0].mxu0
      %1629 = vmatprep.mubr.bf16.mxu0 0
      %1630 = vmatmul.mubr.bf16.gmra.mrb[0].mxu0 %v508
      %v1631 = vpop.f32.mrb[0].mxu0
      %v1632 = vadd.f32 0.0, %v1631
      %v1633 = vpop.f32.mrb[0].mxu0
      %v1634 = vpop.f32.mrb[0].mxu0
      %v1635 = vpop.f32.mrb[0].mxu0
      %1636 = vdwg.mxu0
      %v1637 = vrot.slane %v1399, 2
      %v1638 = vrot.slane %v1402, 2
      %v1639 = vrot.slane %v1407, 2
      %v1640 = vrot.slane %v1414, 2
      %v1641 = vrot.slane %v1417, 2
      %v1642 = vrot.slane %v1422, 2
      %v1643 = vrot.slane %v1429, 2
      %v1644 = vrot.slane %v1432, 2
      %v1645 = vrot.slane %v1437, 2
      %v1646 = vrot.slane %v1444, 2
      %v1647 = vrot.slane %v1447, 2
      %v1648 = vrot.slane %v1452, 2
      %v1649 = vrot.slane %v1459, 2
      %v1650 = vrot.slane %v1462, 2
      %v1651 = vrot.slane %v1467, 2
      %v1652 = vrot.slane %v1474, 2
      %v1653 = vrot.slane %v1477, 2
      %v1654 = vrot.slane %v1482, 2
      %v1655 = vrot.slane %v1489, 2
      %v1656 = vrot.slane %v1492, 2
      %v1657 = vrot.slane %v1497, 2
      %v1658 = vrot.slane %v1504, 2
      %v1659 = vrot.slane %v1507, 2
      %v1660 = vrot.slane %v1512, 2
      %v1661 = vrot.slane %v1519, 2
      %v1662 = vrot.slane %v1522, 2
      %v1663 = vrot.slane %v1527, 2
      %v1664 = vrot.slane %v1534, 2
      %v1665 = vrot.slane %v1537, 2
      %v1666 = vrot.slane %v1542, 2
      %v1667 = vrot.slane %v1549, 2
      %v1668 = vrot.slane %v1552, 2
      %v1669 = vrot.slane %v1557, 2
      %v1670 = vrot.slane %v1564, 2
      %v1671 = vrot.slane %v1567, 2
      %v1672 = vrot.slane %v1572, 2
      %v1673 = vrot.slane %v1579, 2
      %v1674 = vrot.slane %v1582, 2
      %v1675 = vrot.slane %v1587, 2
      %v1676 = vrot.slane %v1594, 2
      %v1677 = vrot.slane %v1597, 2
      %v1678 = vrot.slane %v1602, 2
      %v1679 = vrot.slane %v1609, 2
      %v1680 = vrot.slane %v1612, 2
      %v1681 = vrot.slane %v1617, 2
      %v1682 = vrot.slane %v1624, 2
      %v1683 = vrot.slane %v1627, 2
      %v1684 = vrot.slane %v1632, 2
      %vm1685 = vcmp.lt.s32.totalorder %v1233, 6
      %v1686 = vsel %vm1685, %v1683, %v1684
      %v1687 = vsel %vm1685, %v1682, %v1683
      %v1688 = vsel %vm1685, %v1680, %v1681
      %v1689 = vsel %vm1685, %v1679, %v1680
      %v1690 = vsel %vm1685, %v1677, %v1678
      %v1691 = vsel %vm1685, %v1676, %v1677
      %v1692 = vsel %vm1685, %v1674, %v1675
      %v1693 = vsel %vm1685, %v1673, %v1674
      %v1694 = vsel %vm1685, %v1671, %v1672
      %v1695 = vsel %vm1685, %v1670, %v1671
      %v1696 = vsel %vm1685, %v1668, %v1669
      %v1697 = vsel %vm1685, %v1667, %v1668
      %v1698 = vsel %vm1685, %v1665, %v1666
      %v1699 = vsel %vm1685, %v1664, %v1665
      %v1700 = vsel %vm1685, %v1662, %v1663
      %v1701 = vsel %vm1685, %v1661, %v1662
      %v1702 = vsel %vm1685, %v1659, %v1660
      %v1703 = vsel %vm1685, %v1658, %v1659
      %v1704 = vsel %vm1685, %v1656, %v1657
      %v1705 = vsel %vm1685, %v1655, %v1656
      %v1706 = vsel %vm1685, %v1653, %v1654
      %v1707 = vsel %vm1685, %v1652, %v1653
      %v1708 = vsel %vm1685, %v1650, %v1651
      %v1709 = vsel %vm1685, %v1649, %v1650
      %v1710 = vsel %vm1685, %v1647, %v1648
      %v1711 = vsel %vm1685, %v1646, %v1647
      %v1712 = vsel %vm1685, %v1644, %v1645
      %v1713 = vsel %vm1685, %v1643, %v1644
      %v1714 = vsel %vm1685, %v1641, %v1642
      %v1715 = vsel %vm1685, %v1640, %v1641
      %v1716 = vsel %vm1685, %v1638, %v1639
      %v1717 = vsel %vm1685, %v1637, %v1638
      %v1718 = vadd.f32 %v1267, %v1717
      %v1719 = vadd.f32 %v1268, %v1716
      %v1720 = vadd.f32 %v1269, %v1715
      %v1721 = vadd.f32 %v1270, %v1714
      %v1722 = vadd.f32 %v1271, %v1713
      %v1723 = vadd.f32 %v1272, %v1712
      %v1724 = vadd.f32 %v1273, %v1711
      %v1725 = vadd.f32 %v1274, %v1710
      %v1726 = vadd.f32 %v1275, %v1709
      %v1727 = vadd.f32 %v1276, %v1708
      %v1728 = vadd.f32 %v1277, %v1707
      %v1729 = vadd.f32 %v1278, %v1706
      %v1730 = vadd.f32 %v1279, %v1705
      %v1731 = vadd.f32 %v1280, %v1704
      %v1732 = vadd.f32 %v1281, %v1703
      %v1733 = vadd.f32 %v1282, %v1702
      %v1734 = vadd.f32 %v1283, %v1701
      %v1735 = vadd.f32 %v1284, %v1700
      %v1736 = vadd.f32 %v1285, %v1699
      %v1737 = vadd.f32 %v1286, %v1698
      %v1738 = vadd.f32 %v1287, %v1697
      %v1739 = vadd.f32 %v1288, %v1696
      %v1740 = vadd.f32 %v1289, %v1695
      %v1741 = vadd.f32 %v1290, %v1694
      %v1742 = vadd.f32 %v1291, %v1693
      %v1743 = vadd.f32 %v1292, %v1692
      %v1744 = vadd.f32 %v1293, %v1691
      %v1745 = vadd.f32 %v1294, %v1690
      %v1746 = vadd.f32 %v1295, %v1689
      %v1747 = vadd.f32 %v1296, %v1688
      %v1748 = vadd.f32 %v1297, %v1687
      %v1749 = vadd.f32 %v1298, %v1686
      %v1750 = vmax.f32 %v1718, 0.0
      %v1751 = vmax.f32 %v1719, 0.0
      %v1752 = vmax.f32 %v1720, 0.0
      %v1753 = vmax.f32 %v1721, 0.0
      %v1754 = vmax.f32 %v1722, 0.0
      %v1755 = vmax.f32 %v1723, 0.0
      %v1756 = vmax.f32 %v1724, 0.0
      %v1757 = vmax.f32 %v1725, 0.0
      %v1758 = vmax.f32 %v1726, 0.0
      %v1759 = vmax.f32 %v1727, 0.0
      %v1760 = vmax.f32 %v1728, 0.0
      %v1761 = vmax.f32 %v1729, 0.0
      %v1762 = vmax.f32 %v1730, 0.0
      %v1763 = vmax.f32 %v1731, 0.0
      %v1764 = vmax.f32 %v1732, 0.0
      %v1765 = vmax.f32 %v1733, 0.0
      %v1766 = vmax.f32 %v1734, 0.0
      %v1767 = vmax.f32 %v1735, 0.0
      %v1768 = vmax.f32 %v1736, 0.0
      %v1769 = vmax.f32 %v1737, 0.0
      %v1770 = vmax.f32 %v1738, 0.0
      %v1771 = vmax.f32 %v1739, 0.0
      %v1772 = vmax.f32 %v1740, 0.0
      %v1773 = vmax.f32 %v1741, 0.0
      %v1774 = vmax.f32 %v1742, 0.0
      %v1775 = vmax.f32 %v1743, 0.0
      %v1776 = vmax.f32 %v1744, 0.0
      %v1777 = vmax.f32 %v1745, 0.0
      %v1778 = vmax.f32 %v1746, 0.0
      %v1779 = vmax.f32 %v1747, 0.0
      %v1780 = vmax.f32 %v1748, 0.0
      %v1781 = vmax.f32 %v1749, 0.0
      %1782 = vst [vmem:[%s259] sm:$0xff] %v1750
      %1783 = vst [vmem:[%s259 + $0x8] sm:$0xff] %v1751
      %1784 = vst [vmem:[%s259 + $0x10] sm:$0xff] %v1752
      %1785 = vst [vmem:[%s259 + $0x18] sm:$0xff] %v1753
      %1786 = vst [vmem:[%s259 + $0x20] sm:$0xff] %v1754
      %1787 = vst [vmem:[%s259 + $0x28] sm:$0xff] %v1755
      %1788 = vst [vmem:[%s259 + $0x30] sm:$0xff] %v1756
      %1789 = vst [vmem:[%s259 + $0x38] sm:$0xff] %v1757
      %1790 = vst [vmem:[%s259 + $0x40] sm:$0xff] %v1758
      %1791 = vst [vmem:[%s259 + $0x48] sm:$0xff] %v1759
      %1792 = vst [vmem:[%s259 + $0x50] sm:$0xff] %v1760
      %1793 = vst [vmem:[%s259 + $0x58] sm:$0xff] %v1761
      %1794 = vst [vmem:[%s259 + $0x60] sm:$0xff] %v1762
      %1795 = vst [vmem:[%s259 + $0x68] sm:$0xff] %v1763
      %1796 = vst [vmem:[%s259 + $0x70] sm:$0xff] %v1764
      %1797 = vst [vmem:[%s259 + $0x78] sm:$0xff] %v1765
      %1798 = vst [vmem:[%s259 + $0x80] sm:$0xff] %v1766
      %1799 = vst [vmem:[%s259 + $0x88] sm:$0xff] %v1767
      %1800 = vst [vmem:[%s259 + $0x90] sm:$0xff] %v1768
      %1801 = vst [vmem:[%s259 + $0x98] sm:$0xff] %v1769
      %1802 = vst [vmem:[%s259 + $0xa0] sm:$0xff] %v1770
      %1803 = vst [vmem:[%s259 + $0xa8] sm:$0xff] %v1771
      %1804 = vst [vmem:[%s259 + $0xb0] sm:$0xff] %v1772
      %1805 = vst [vmem:[%s259 + $0xb8] sm:$0xff] %v1773
      %1806 = vst [vmem:[%s259 + $0xc0] sm:$0xff] %v1774
      %1807 = vst [vmem:[%s259 + $0xc8] sm:$0xff] %v1775
      %1808 = vst [vmem:[%s259 + $0xd0] sm:$0xff] %v1776
      %1809 = vst [vmem:[%s259 + $0xd8] sm:$0xff] %v1777
      %1810 = vst [vmem:[%s259 + $0xe0] sm:$0xff] %v1778
      %1811 = vst [vmem:[%s259 + $0xe8] sm:$0xff] %v1779
      %1812 = vst [vmem:[%s259 + $0xf0] sm:$0xff] %v1780
      %1813 = vst [vmem:[%s259 + $0xf8] sm:$0xff] %v1781
      %s1814 = smul.u32 16, %s20
      %p1815 = scmp.lt.s32.totalorder %s19, 1
      %s1816 = scalar_select %p1815, %s19, 1
      %p1817 = scmp.lt.s32.totalorder %s1814, 15
      %s1818 = scalar_select %p1817, %s1814, 15
      %p1819 = scmp.lt.s32.totalorder %s21, 0
      %s1820 = scalar_select %p1819, %s21, 0
      %s1821 = smul.addr %s1818, 2
      %s1822 = sadd.s32 %s1820, %s1821
      %s1823 = smul.addr %s1816, 32
      %s1824 = sadd.s32 %s1822, %s1823
      %s1825 = smul.addr %s1824, 8
      %s1826 = scalar_lea.vmem %s3, %s1825
      // Predicated region
      $region33: #{_lambda_.1} parent=31 // pred_check
        %p1827 = pneg %p135
      $region34: #{_lambda_.1} parent=31 // pred_check_branch
        %1829 = sbr.rel (%p1827) target = $region36
      $region35: #{_lambda_.1} parent=31 // pred_region
        %s1830 = smul.u32 16, %s20
      $region36: #{_lambda_.1} parent=31 // pred_fallthru
        _
    $region32: #{_lambda_.1} parent=5 // pred_fallthru
      _
    %p1831 = scmp.le.s32.totalorder 2, %s9
    // Predicated region
    $region37: #{_lambda_.1} parent=5 // pred_check
      %p1832 = pneg %p1831
    $region38: #{_lambda_.1} parent=5 // pred_check_branch
      %1834 = sbr.rel (%p1832) target = $region40
    $region39: #{_lambda_.1} parent=5 // pred_region
      %s1835 = ssub.s32 %s9, 2
      // Predicated region
      $region41: #{_lambda_.1} parent=39 // pred_check
        %p1836 = pneg %p141
      $region42: #{_lambda_.1} parent=39 // pred_check_branch
        %1838 = sbr.rel (%p1836) target = $region44
      $region43: #{_lambda_.1} parent=39 // pred_region
        %s1839 = smul.u32 16, %s23
        %p1840 = scmp.lt.s32.totalorder %s22, 1
        %s1841 = scalar_select %p1840, %s22, 1
        %p1842 = scmp.lt.s32.totalorder %s1839, 15
        %s1843 = scalar_select %p1842, %s1839, 15
        %p1844 = scmp.lt.s32.totalorder %s24, 0
        %s1845 = scalar_select %p1844, %s24, 0
        %s1846 = smul.addr %s1843, 2
        %s1847 = sadd.s32 %s1845, %s1846
        %s1848 = smul.addr %s1841, 32
        %s1849 = sadd.s32 %s1847, %s1848
        %s1850 = smul.addr %s1849, 8
        %s1851 = scalar_lea.vmem %s3, %s1850
      $region44: #{_lambda_.1} parent=39 // pred_fallthru
        _
    $region40: #{_lambda_.1} parent=5 // pred_fallthru
      _
  $region6: #{_lambda_.1} parent=0 // loop_footer
    %s13 = sadd.s32 1, %s9
  $region7: #{_lambda_.1} parent=0 // loop_footer_branch
    %8 = sbr.rel target = $region3
  $region8: #{_lambda_.1} parent=0 // loop_exit
    _

</llo_original>
